<compile_context>
chip_gen: v7x
topology: tpu7x:2x2x1
jax: 0.10.0
libtpu: 0.0.40
codegen_flags: <defaults>
</compile_context>

<pallas_src>
import functools

import jax
import jax.numpy as jnp
import numpy as np
from jax.experimental import pallas as pl
from jax.experimental.pallas import tpu as pltpu

_OUT_LANES = 128  # lane-dense output slab width


def _round8(x):
    return max(8, ((int(x) + 7) // 8) * 8)


def _layer_norm(x, gamma, beta, eps=1e-5):
    """PyTorch nn.LayerNorm semantics (biased variance, eps=1e-5).

    Single-pass statistics: var = E[x^2] - mean^2, so the two row reductions
    are independent and can overlap; rsqrt goes to the EUP (free slot)."""
    x = x.astype(jnp.float32)
    mu = jnp.mean(x, axis=-1, keepdims=True)
    var = jnp.mean(x * x, axis=-1, keepdims=True) - mu * mu
    inv = jax.lax.rsqrt(var + eps)
    return (x - mu) * (gamma * inv) + beta


def _regression_head_kernel(
    scale_ref,   # SMEM (1, 1): 1 / (tau * sqrt(H))
    q_ref,       # VMEM (TB, D)     query tile
    r_ref,       # VMEM (TB*N, D)   flattened reference tile (pipelined)
    vals_ref,    # VMEM (TB, N)     reference values
    ln_d_ref,    # VMEM (4, D) f32: [lnq1_g, lnq1_b, lnr1_g, lnr1_b]
    ln_h_ref,    # VMEM (6, H) f32: [bq, lnq2_g, lnq2_b, br, lnr2_g, lnr2_b]
    w_ref,       # VMEM (2, D, H) bf16: [wq, wr]   (resident across grid steps)
    out_ref,     # VMEM (TB, 128) f32: pred broadcast across lanes
    *,
    n_refs,
):
    scale = scale_ref[0, 0]
    ln_d = ln_d_ref[...]
    ln_h = ln_h_ref[...]

    # --- query projection: LN -> Linear (bf16 MXU, f32 acc) -> LN ------------
    q = _layer_norm(q_ref[...], ln_d[0:1, :], ln_d[1:2, :])
    q = jnp.dot(q.astype(jnp.bfloat16), w_ref[0],
                preferred_element_type=jnp.float32) + ln_h[0:1, :]
    # Fold 1/(tau*sqrt(H)) into the second LN's affine params ((1,H) op, not a
    # (TB,H) pass): scale*(gamma*xhat + beta) == LN with (scale*gamma, scale*beta)
    q = _layer_norm(q, ln_h[1:2, :] * scale, ln_h[2:3, :] * scale)        # (TB, H)

    # --- reference projection on the flattened (TB*N, D) tile ----------------
    r = _layer_norm(r_ref[...], ln_d[2:3, :], ln_d[3:4, :])
    r = jnp.dot(r.astype(jnp.bfloat16), w_ref[1],
                preferred_element_type=jnp.float32) + ln_h[3:4, :]
    r = _layer_norm(r, ln_h[4:5, :], ln_h[5:6, :])                        # (TB*N, H)

    tb, h = q.shape
    # N multiple of 8 -> sublane-aligned split of the leading axis (free relayout).
    r3 = r.reshape(tb, n_refs, h)

    # --- scores on the MXU (batched contraction, f32) ------------------------
    # (TB,1,H) x (TB,N,H) -> (TB,1,N); keeps the big f32 product off VPU/XLU
    # and off VMEM.  MXU is otherwise nearly idle here.
    s = jnp.einsum("bkh,bnh->bkn", q.reshape(tb, 1, h), r3,
                   preferred_element_type=jnp.float32).reshape(tb, n_refs)

    # --- softmax over refs + weighted sum (f32 VPU/EUP epilogue) -------------
    s = s - jnp.max(s, axis=-1, keepdims=True)
    e = jnp.exp(s)
    w = e * pl.reciprocal(jnp.sum(e, axis=-1, keepdims=True), approx=True)
    pred = jnp.sum(w * vals_ref[...].astype(jnp.float32), axis=-1, keepdims=True)
    out_ref[...] = jnp.broadcast_to(pred, out_ref.shape)   # lane-dense store


# --------------------------------------------------------------------------- #
# Tile sizing / VMEM budgeting
# --------------------------------------------------------------------------- #
def _vmem_capacity_bytes():
    try:
        return int(pltpu.get_tpu_info().vmem_capacity_bytes)
    except Exception:
        return 64 << 20  # conservative fallback (v7x per-core VMEM)


def _per_batch_row_bytes(N, D, H, in_itemsize):
    # Per batch row: double-buffered input tiles (query / flat refs / values /
    # output slab) PLUS in-kernel intermediates on the reference path
    # (f32 LN output, bf16 cast, f32 projection (+ headroom for relayouts)).
    chain = 2 * in_itemsize * D + 6 * D + 6 * H          # one projected row
    return (N * chain                                    # reference rows
            + chain + 8 * H                              # query row
            + 2 * 4 * N                                  # values tile
            + 2 * 4 * _OUT_LANES)                        # output slab


def _pick_block_b(B, N, D, H, in_itemsize, vmem_budget_bytes):
    per_row = _per_batch_row_bytes(N, D, H, in_itemsize)
    tb_cap = max(8, int(vmem_budget_bytes // per_row) // 8 * 8)
    # Aim for ~1024 reference rows per tile (large-tile HBM-roofline regime),
    # VMEM permitting.
    tb_target = min(tb_cap, _round8(pl.cdiv(1024, N)))

    if B % 8 == 0:
        # Prefer a tile that divides B exactly: no wrapper-side padding copy.
        divs = [t for t in range(8, min(tb_target, B) + 1, 8) if B % t == 0]
        if divs:
            tb = max(divs)
            if tb == B and B >= 16:
                # >= 2 grid steps so v7x megacore keeps both TensorCores busy.
                halves = [t for t in divs if t <= B // 2]
                if halves:
                    tb = max(halves)
            return tb

    tb = min(tb_target, _round8(B))
    if B >= 16 and pl.cdiv(B, tb) < 2:
        tb = _round8(pl.cdiv(B, 2))
    return tb


# --------------------------------------------------------------------------- #
# Wrapper
# --------------------------------------------------------------------------- #
def regression_head(query_repr, ref_repr, ref_values, tau, params, *, block_b=None):
    """Pallas implementation of RegressionHead.forward (num_layers=1, top_k=None)."""
    B, N, D = ref_repr.shape
    H = params["wq"].shape[1]
    in_itemsize = jnp.dtype(ref_repr.dtype).itemsize

    cap = _vmem_capacity_bytes()
    budget = int(cap * 0.6)  # headroom for compiler scratch / resident params
    tb = block_b if block_b is not None else _pick_block_b(B, N, D, H, in_itemsize, budget)
    tb = _round8(tb)

    Bp = pl.cdiv(B, tb) * tb
    if Bp != B:
        # TODO(synk): a ragged last tile (in-kernel mask) would avoid this
        # full-tensor pad copy; with the divisor-preferring tile picker this
        # path only triggers for awkward batch sizes.
        pad = Bp - B
        query_repr = jnp.pad(query_repr, ((0, pad), (0, 0)))
        ref_repr = jnp.pad(ref_repr, ((0, pad), (0, 0), (0, 0)))
        ref_values = jnp.pad(ref_values, ((0, pad), (0, 0)))

    ref_flat = ref_repr.reshape(Bp * N, D)

    # Consolidated, VMEM-resident parameters (3 small DMAs, constant index_maps).
    ln_d = jnp.concatenate(
        [params["lnq1_g"], params["lnq1_b"], params["lnr1_g"], params["lnr1_b"]],
        axis=0).astype(jnp.float32)                                  # (4, D)
    ln_h = jnp.concatenate(
        [params["bq"], params["lnq2_g"], params["lnq2_b"],
         params["br"], params["lnr2_g"], params["lnr2_b"]],
        axis=0).astype(jnp.float32)                                  # (6, H)
    w_stack = jnp.stack([params["wq"], params["wr"]], axis=0).astype(jnp.bfloat16)  # (2,D,H)

    scale_arr = (1.0 / (jnp.asarray(tau, jnp.float32) * (float(H) ** 0.5))).reshape(1, 1)

    # Per-generation VMEM limit matching the tile-size estimate.
    per_row = _per_batch_row_bytes(N, D, H, in_itemsize)
    resident = 2 * (4 * D * 4 + 6 * H * 4 + 2 * D * H * 2)
    est = tb * per_row + resident + (4 << 20)
    vmem_limit = int(min(0.9 * cap, max(est, 48 << 20)))

    grid = (Bp // tb,)
    out = pl.pallas_call(
        functools.partial(_regression_head_kernel, n_refs=N),
        out_shape=jax.ShapeDtypeStruct((Bp, _OUT_LANES), jnp.float32),
        grid=grid,
        in_specs=[
            pl.BlockSpec((1, 1), lambda i: (0, 0), memory_space=pltpu.MemorySpace.SMEM),
            pl.BlockSpec((tb, D), lambda i: (i, 0)),          # query tile
            pl.BlockSpec((tb * N, D), lambda i: (i, 0)),      # flattened ref tile
            pl.BlockSpec((tb, N), lambda i: (i, 0)),          # ref_values tile
            pl.BlockSpec((4, D), lambda i: (0, 0)),           # LN(D) params, resident
            pl.BlockSpec((6, H), lambda i: (0, 0)),           # LN(H)/bias params, resident
            pl.BlockSpec((2, D, H), lambda i: (0, 0, 0)),     # bf16 weights, resident
        ],
        out_specs=pl.BlockSpec((tb, _OUT_LANES), lambda i: (i, 0)),
        compiler_params=pltpu.CompilerParams(
            dimension_semantics=("parallel",),
            vmem_limit_bytes=vmem_limit),
    )(scale_arr, query_repr, ref_flat, ref_values, ln_d, ln_h, w_stack)

    return out[:B, 0]


# --------------------------------------------------------------------------- #
# Pure-JAX reference + demo
# --------------------------------------------------------------------------- #
def _reference(query_repr, ref_repr, ref_values, tau, params):
    """Pure-JAX f32 reference mirroring the PyTorch forward."""
    def proj(x, g1, b1, w, b, g2, b2):
        x = _layer_norm(x, g1, b1)
        x = x @ w + b
        return _layer_norm(x, g2, b2)

    q = proj(query_repr, params["lnq1_g"][0], params["lnq1_b"][0],
             params["wq"], params["bq"][0], params["lnq2_g"][0], params["lnq2_b"][0])
    r = proj(ref_repr, params["lnr1_g"][0], params["lnr1_b"][0],
             params["wr"], params["br"][0], params["lnr2_g"][0], params["lnr2_b"][0])
    H = q.shape[-1]
    scores = jnp.einsum("bnh,bh->bn", r, q) / (float(H) ** 0.5)
    w = scores / tau
    w = w - jnp.max(w, axis=-1, keepdims=True)
    w = jax.nn.softmax(w, axis=-1)
    return jnp.sum(w * ref_values, axis=-1)


def _init_params(key, D, H):
    k1, k2, k3, k4 = jax.random.split(key, 4)
    f32 = jnp.float32
    return {
        # query projection params
        "lnq1_g": jnp.ones((1, D), f32), "lnq1_b": jnp.zeros((1, D), f32),
        "wq": (jax.random.normal(k1, (D, H), f32) * 0.05),
        "bq": (jax.random.normal(k2, (1, H), f32) * 0.01),
        "lnq2_g": jnp.ones((1, H), f32), "lnq2_b": jnp.zeros((1, H), f32),
        # reference projection params
        "lnr1_g": jnp.ones((1, D), f32), "lnr1_b": jnp.zeros((1, D), f32),
        "wr": (jax.random.normal(k3, (D, H), f32) * 0.05),
        "br": (jax.random.normal(k4, (1, H), f32) * 0.01),
        "lnr2_g": jnp.ones((1, H), f32), "lnr2_b": jnp.zeros((1, H), f32),
    }


if __name__ == "__main__":
    # Small but lane-dense shapes (D = H = 128) so the MXU/vreg lanes are full.
    B, N, D, H = 16, 16, 128, 128
    tau = 0.5

    key = jax.random.PRNGKey(0)
    kq, kr, kv, kp = jax.random.split(key, 4)
    query_repr = jax.random.normal(kq, (B, D), jnp.float32)
    ref_repr = jax.random.normal(kr, (B, N, D), jnp.float32)
    ref_values = jax.random.uniform(kv, (B, N), jnp.float32)
    params = _init_params(kp, D, H)

    # Auto tile picker: divides B exactly (no padding) and yields >=2 grid steps.
    pred = regression_head(query_repr, ref_repr, ref_values, tau, params)
    pred = jax.block_until_ready(pred)

    ref = _reference(query_repr, ref_repr, ref_values, tau, params)
    # Tolerance loosened vs. an all-f32 version: projection matmuls use bf16
    # operands (f32 accumulation) and the softmax uses an approx reciprocal.
    np.testing.assert_allclose(np.asarray(pred), np.asarray(ref), rtol=5e-2, atol=2e-2)

    print("KERNEL_OK")
</pallas_src>

<mosaic_0001>
module attributes {stable_mosaic.version = 11 : i64} {
  func.func @_regression_head_kernel(%arg0: i32, %arg1: memref<1x1xf32, #tpu.memory_space<smem>>, %arg2: memref<8x128xf32, #tpu.memory_space<vmem>>, %arg3: memref<128x128xf32, #tpu.memory_space<vmem>>, %arg4: memref<8x16xf32, #tpu.memory_space<vmem>>, %arg5: memref<4x128xf32, #tpu.memory_space<vmem>>, %arg6: memref<6x128xf32, #tpu.memory_space<vmem>>, %arg7: memref<2x128x128xbf16, #tpu.memory_space<vmem>>, %arg8: memref<8x128xf32, #tpu.memory_space<vmem>>) attributes {dimension_semantics = [#tpu.dimension_semantics<parallel>], iteration_bounds = array<i64: 2>, scalar_prefetch = 0 : i64, scratch_operands = 0 : i64, tpu.core_type = #tpu.core_type<tc>, window_params = [{transform_indices = @transform_0, window_bounds = array<i64: 1, 1>}, {transform_indices = @transform_1, window_bounds = array<i64: 8, 128>}, {transform_indices = @transform_2, window_bounds = array<i64: 128, 128>}, {transform_indices = @transform_3, window_bounds = array<i64: 8, 16>}, {pipeline_mode = #tpu.pipeline_mode<synchronous>, transform_indices = @transform_4, window_bounds = array<i64: 4, 128>}, {pipeline_mode = #tpu.pipeline_mode<synchronous>, transform_indices = @transform_5, window_bounds = array<i64: 6, 128>}, {pipeline_mode = #tpu.pipeline_mode<synchronous>, transform_indices = @transform_6, window_bounds = array<i64: 2, 128, 128>}, {transform_indices = @transform_7, window_bounds = array<i64: 8, 128>}]} {
    %c0 = arith.constant 0 : index
    %c0_0 = arith.constant 0 : index
    %0 = memref.load %arg1[%c0, %c0_0] : memref<1x1xf32, #tpu.memory_space<smem>>
    %c0_1 = arith.constant 0 : index
    %c0_2 = arith.constant 0 : index
    %1 = vector.load %arg5[%c0_1, %c0_2] : memref<4x128xf32, #tpu.memory_space<vmem>>, vector<4x128xf32>
    %c0_3 = arith.constant 0 : index
    %c0_4 = arith.constant 0 : index
    %2 = vector.load %arg6[%c0_3, %c0_4] : memref<6x128xf32, #tpu.memory_space<vmem>>, vector<6x128xf32>
    %c0_5 = arith.constant 0 : index
    %c0_6 = arith.constant 0 : index
    %3 = vector.load %arg2[%c0_5, %c0_6] : memref<8x128xf32, #tpu.memory_space<vmem>>, vector<8x128xf32>
    %4 = vector.extract_strided_slice %1 {offsets = [0, 0], sizes = [1, 128], strides = [1, 1]} : vector<4x128xf32> to vector<1x128xf32>
    %5 = vector.extract_strided_slice %1 {offsets = [1, 0], sizes = [1, 128], strides = [1, 1]} : vector<4x128xf32> to vector<1x128xf32>
    %cst = arith.constant dense<0.000000e+00> : vector<8xf32>
    %6 = vector.multi_reduction <add>, %3, %cst [1] : vector<8x128xf32> to vector<8xf32>
    %7 = vector.shape_cast %6 : vector<8xf32> to vector<8x1xf32>
    %cst_7 = arith.constant 1.280000e+02 : f32
    %8 = vector.broadcast %cst_7 : f32 to vector<8x1xf32>
    %9 = arith.divf %7, %8 : vector<8x1xf32>
    %10 = arith.mulf %3, %3 : vector<8x128xf32>
    %cst_8 = arith.constant dense<0.000000e+00> : vector<8xf32>
    %11 = vector.multi_reduction <add>, %10, %cst_8 [1] : vector<8x128xf32> to vector<8xf32>
    %12 = vector.shape_cast %11 : vector<8xf32> to vector<8x1xf32>
    %cst_9 = arith.constant 1.280000e+02 : f32
    %13 = vector.broadcast %cst_9 : f32 to vector<8x1xf32>
    %14 = arith.divf %12, %13 : vector<8x1xf32>
    %15 = arith.mulf %9, %9 : vector<8x1xf32>
    %16 = arith.subf %14, %15 : vector<8x1xf32>
    %cst_10 = arith.constant 9.99999974E-6 : f32
    %17 = vector.broadcast %cst_10 : f32 to vector<8x1xf32>
    %18 = arith.addf %16, %17 : vector<8x1xf32>
    %19 = math.rsqrt %18 : vector<8x1xf32>
    %20 = vector.broadcast %9 : vector<8x1xf32> to vector<8x128xf32>
    %21 = arith.subf %3, %20 : vector<8x128xf32>
    %22 = vector.broadcast %4 : vector<1x128xf32> to vector<8x128xf32>
    %23 = vector.broadcast %19 : vector<8x1xf32> to vector<8x128xf32>
    %24 = arith.mulf %22, %23 : vector<8x128xf32>
    %25 = arith.mulf %21, %24 : vector<8x128xf32>
    %26 = vector.broadcast %5 : vector<1x128xf32> to vector<8x128xf32>
    %27 = arith.addf %25, %26 : vector<8x128xf32>
    %28 = arith.truncf %27 : vector<8x128xf32> to vector<8x128xbf16>
    %c0_11 = arith.constant 0 : index
    %c0_12 = arith.constant 0 : index
    %c0_13 = arith.constant 0 : index
    %29 = vector.load %arg7[%c0_11, %c0_12, %c0_13] : memref<2x128x128xbf16, #tpu.memory_space<vmem>>, vector<1x128x128xbf16>
    %30 = vector.shape_cast %29 : vector<1x128x128xbf16> to vector<128x128xbf16>
    %cst_14 = arith.constant dense<0.000000e+00> : vector<8x128xf32>
    %31 = tpu.matmul %28, %30, %cst_14 {dimension_numbers = #tpu.dot_dimension_numbers<[1], [0], [0], [1], [0, 0, 1, 1], [], []>} : vector<8x128xbf16>, vector<128x128xbf16>, vector<8x128xf32> -> vector<8x128xf32>
    %32 = vector.extract_strided_slice %2 {offsets = [0, 0], sizes = [1, 128], strides = [1, 1]} : vector<6x128xf32> to vector<1x128xf32>
    %33 = vector.broadcast %32 : vector<1x128xf32> to vector<8x128xf32>
    %34 = arith.addf %31, %33 : vector<8x128xf32>
    %35 = vector.extract_strided_slice %2 {offsets = [1, 0], sizes = [1, 128], strides = [1, 1]} : vector<6x128xf32> to vector<1x128xf32>
    %36 = vector.broadcast %0 : f32 to vector<1x128xf32>
    %37 = arith.mulf %35, %36 : vector<1x128xf32>
    %38 = vector.extract_strided_slice %2 {offsets = [2, 0], sizes = [1, 128], strides = [1, 1]} : vector<6x128xf32> to vector<1x128xf32>
    %39 = vector.broadcast %0 : f32 to vector<1x128xf32>
    %40 = arith.mulf %38, %39 : vector<1x128xf32>
    %cst_15 = arith.constant dense<0.000000e+00> : vector<8xf32>
    %41 = vector.multi_reduction <add>, %34, %cst_15 [1] : vector<8x128xf32> to vector<8xf32>
    %42 = vector.shape_cast %41 : vector<8xf32> to vector<8x1xf32>
    %cst_16 = arith.constant 1.280000e+02 : f32
    %43 = vector.broadcast %cst_16 : f32 to vector<8x1xf32>
    %44 = arith.divf %42, %43 : vector<8x1xf32>
    %45 = arith.mulf %34, %34 : vector<8x128xf32>
    %cst_17 = arith.constant dense<0.000000e+00> : vector<8xf32>
    %46 = vector.multi_reduction <add>, %45, %cst_17 [1] : vector<8x128xf32> to vector<8xf32>
    %47 = vector.shape_cast %46 : vector<8xf32> to vector<8x1xf32>
    %cst_18 = arith.constant 1.280000e+02 : f32
    %48 = vector.broadcast %cst_18 : f32 to vector<8x1xf32>
    %49 = arith.divf %47, %48 : vector<8x1xf32>
    %50 = arith.mulf %44, %44 : vector<8x1xf32>
    %51 = arith.subf %49, %50 : vector<8x1xf32>
    %cst_19 = arith.constant 9.99999974E-6 : f32
    %52 = vector.broadcast %cst_19 : f32 to vector<8x1xf32>
    %53 = arith.addf %51, %52 : vector<8x1xf32>
    %54 = math.rsqrt %53 : vector<8x1xf32>
    %55 = vector.broadcast %44 : vector<8x1xf32> to vector<8x128xf32>
    %56 = arith.subf %34, %55 : vector<8x128xf32>
    %57 = vector.broadcast %37 : vector<1x128xf32> to vector<8x128xf32>
    %58 = vector.broadcast %54 : vector<8x1xf32> to vector<8x128xf32>
    %59 = arith.mulf %57, %58 : vector<8x128xf32>
    %60 = arith.mulf %56, %59 : vector<8x128xf32>
    %61 = vector.broadcast %40 : vector<1x128xf32> to vector<8x128xf32>
    %62 = arith.addf %60, %61 : vector<8x128xf32>
    %c0_20 = arith.constant 0 : index
    %c0_21 = arith.constant 0 : index
    %63 = vector.load %arg3[%c0_20, %c0_21] : memref<128x128xf32, #tpu.memory_space<vmem>>, vector<128x128xf32>
    %64 = vector.extract_strided_slice %1 {offsets = [2, 0], sizes = [1, 128], strides = [1, 1]} : vector<4x128xf32> to vector<1x128xf32>
    %65 = vector.extract_strided_slice %1 {offsets = [3, 0], sizes = [1, 128], strides = [1, 1]} : vector<4x128xf32> to vector<1x128xf32>
    %cst_22 = arith.constant dense<0.000000e+00> : vector<128xf32>
    %66 = vector.multi_reduction <add>, %63, %cst_22 [1] : vector<128x128xf32> to vector<128xf32>
    %67 = vector.shape_cast %66 : vector<128xf32> to vector<128x1xf32>
    %cst_23 = arith.constant 1.280000e+02 : f32
    %68 = vector.broadcast %cst_23 : f32 to vector<128x1xf32>
    %69 = arith.divf %67, %68 : vector<128x1xf32>
    %70 = arith.mulf %63, %63 : vector<128x128xf32>
    %cst_24 = arith.constant dense<0.000000e+00> : vector<128xf32>
    %71 = vector.multi_reduction <add>, %70, %cst_24 [1] : vector<128x128xf32> to vector<128xf32>
    %72 = vector.shape_cast %71 : vector<128xf32> to vector<128x1xf32>
    %cst_25 = arith.constant 1.280000e+02 : f32
    %73 = vector.broadcast %cst_25 : f32 to vector<128x1xf32>
    %74 = arith.divf %72, %73 : vector<128x1xf32>
    %75 = arith.mulf %69, %69 : vector<128x1xf32>
    %76 = arith.subf %74, %75 : vector<128x1xf32>
    %cst_26 = arith.constant 9.99999974E-6 : f32
    %77 = vector.broadcast %cst_26 : f32 to vector<128x1xf32>
    %78 = arith.addf %76, %77 : vector<128x1xf32>
    %79 = math.rsqrt %78 : vector<128x1xf32>
    %80 = vector.broadcast %69 : vector<128x1xf32> to vector<128x128xf32>
    %81 = arith.subf %63, %80 : vector<128x128xf32>
    %82 = vector.broadcast %64 : vector<1x128xf32> to vector<128x128xf32>
    %83 = vector.broadcast %79 : vector<128x1xf32> to vector<128x128xf32>
    %84 = arith.mulf %82, %83 : vector<128x128xf32>
    %85 = arith.mulf %81, %84 : vector<128x128xf32>
    %86 = vector.broadcast %65 : vector<1x128xf32> to vector<128x128xf32>
    %87 = arith.addf %85, %86 : vector<128x128xf32>
    %88 = arith.truncf %87 : vector<128x128xf32> to vector<128x128xbf16>
    %c1 = arith.constant 1 : index
    %c0_27 = arith.constant 0 : index
    %c0_28 = arith.constant 0 : index
    %89 = vector.load %arg7[%c1, %c0_27, %c0_28] : memref<2x128x128xbf16, #tpu.memory_space<vmem>>, vector<1x128x128xbf16>
    %90 = vector.shape_cast %89 : vector<1x128x128xbf16> to vector<128x128xbf16>
    %cst_29 = arith.constant dense<0.000000e+00> : vector<128x128xf32>
    %91 = tpu.matmul %88, %90, %cst_29 {dimension_numbers = #tpu.dot_dimension_numbers<[1], [0], [0], [1], [0, 0, 1, 1], [], []>} : vector<128x128xbf16>, vector<128x128xbf16>, vector<128x128xf32> -> vector<128x128xf32>
    %92 = vector.extract_strided_slice %2 {offsets = [3, 0], sizes = [1, 128], strides = [1, 1]} : vector<6x128xf32> to vector<1x128xf32>
    %93 = vector.broadcast %92 : vector<1x128xf32> to vector<128x128xf32>
    %94 = arith.addf %91, %93 : vector<128x128xf32>
    %95 = vector.extract_strided_slice %2 {offsets = [4, 0], sizes = [1, 128], strides = [1, 1]} : vector<6x128xf32> to vector<1x128xf32>
    %96 = vector.extract_strided_slice %2 {offsets = [5, 0], sizes = [1, 128], strides = [1, 1]} : vector<6x128xf32> to vector<1x128xf32>
    %cst_30 = arith.constant dense<0.000000e+00> : vector<128xf32>
    %97 = vector.multi_reduction <add>, %94, %cst_30 [1] : vector<128x128xf32> to vector<128xf32>
    %98 = vector.shape_cast %97 : vector<128xf32> to vector<128x1xf32>
    %cst_31 = arith.constant 1.280000e+02 : f32
    %99 = vector.broadcast %cst_31 : f32 to vector<128x1xf32>
    %100 = arith.divf %98, %99 : vector<128x1xf32>
    %101 = arith.mulf %94, %94 : vector<128x128xf32>
    %cst_32 = arith.constant dense<0.000000e+00> : vector<128xf32>
    %102 = vector.multi_reduction <add>, %101, %cst_32 [1] : vector<128x128xf32> to vector<128xf32>
    %103 = vector.shape_cast %102 : vector<128xf32> to vector<128x1xf32>
    %cst_33 = arith.constant 1.280000e+02 : f32
    %104 = vector.broadcast %cst_33 : f32 to vector<128x1xf32>
    %105 = arith.divf %103, %104 : vector<128x1xf32>
    %106 = arith.mulf %100, %100 : vector<128x1xf32>
    %107 = arith.subf %105, %106 : vector<128x1xf32>
    %cst_34 = arith.constant 9.99999974E-6 : f32
    %108 = vector.broadcast %cst_34 : f32 to vector<128x1xf32>
    %109 = arith.addf %107, %108 : vector<128x1xf32>
    %110 = math.rsqrt %109 : vector<128x1xf32>
    %111 = vector.broadcast %100 : vector<128x1xf32> to vector<128x128xf32>
    %112 = arith.subf %94, %111 : vector<128x128xf32>
    %113 = vector.broadcast %95 : vector<1x128xf32> to vector<128x128xf32>
    %114 = vector.broadcast %110 : vector<128x1xf32> to vector<128x128xf32>
    %115 = arith.mulf %113, %114 : vector<128x128xf32>
    %116 = arith.mulf %112, %115 : vector<128x128xf32>
    %117 = vector.broadcast %96 : vector<1x128xf32> to vector<128x128xf32>
    %118 = arith.addf %116, %117 : vector<128x128xf32>
    %119 = vector.shape_cast %118 : vector<128x128xf32> to vector<8x16x128xf32>
    %120 = vector.shape_cast %62 : vector<8x128xf32> to vector<8x1x128xf32>
    "tpu.trace_start"() <{level = 10 : i32, message = "bkh,bnh->bkn"}> : () -> ()
    %cst_35 = arith.constant dense<0.000000e+00> : vector<8x1x16xf32>
    %121 = tpu.matmul %120, %119, %cst_35 {dimension_numbers = #tpu.dot_dimension_numbers<[2], [2], [1], [1], [0, 0, 0, 1, 1, 1], [0], [0]>} : vector<8x1x128xf32>, vector<8x16x128xf32>, vector<8x1x16xf32> -> vector<8x1x16xf32>
    "tpu.trace_stop"() : () -> ()
    %122 = vector.shape_cast %121 : vector<8x1x16xf32> to vector<8x16xf32>
    %cst_36 = arith.constant dense<0xFF800000> : vector<8xf32>
    %123 = vector.multi_reduction <maximumf>, %122, %cst_36 [1] : vector<8x16xf32> to vector<8xf32>
    %124 = vector.shape_cast %123 : vector<8xf32> to vector<8x1xf32>
    %125 = vector.broadcast %124 : vector<8x1xf32> to vector<8x16xf32>
    %126 = arith.subf %122, %125 : vector<8x16xf32>
    %127 = math.exp %126 : vector<8x16xf32>
    %cst_37 = arith.constant dense<0.000000e+00> : vector<8xf32>
    %128 = vector.multi_reduction <add>, %127, %cst_37 [1] : vector<8x16xf32> to vector<8xf32>
    %129 = vector.shape_cast %128 : vector<8xf32> to vector<8x1xf32>
    %130 = tpu.reciprocal %129 {approx = true} : vector<8x1xf32> -> vector<8x1xf32>
    %131 = vector.broadcast %130 : vector<8x1xf32> to vector<8x16xf32>
    %132 = arith.mulf %127, %131 : vector<8x16xf32>
    %c0_38 = arith.constant 0 : index
    %c0_39 = arith.constant 0 : index
    %133 = vector.load %arg4[%c0_38, %c0_39] : memref<8x16xf32, #tpu.memory_space<vmem>>, vector<8x16xf32>
    %134 = arith.mulf %132, %133 : vector<8x16xf32>
    %cst_40 = arith.constant dense<0.000000e+00> : vector<8xf32>
    %135 = vector.multi_reduction <add>, %134, %cst_40 [1] : vector<8x16xf32> to vector<8xf32>
    %136 = vector.shape_cast %135 : vector<8xf32> to vector<8x1xf32>
    %137 = vector.shape_cast %136 : vector<8x1xf32> to vector<8x1xf32>
    %138 = vector.broadcast %137 : vector<8x1xf32> to vector<8x128xf32>
    %c0_41 = arith.constant 0 : index
    %c0_42 = arith.constant 0 : index
    %139 = vector.load %arg8[%c0_41, %c0_42] : memref<8x128xf32, #tpu.memory_space<vmem>>, vector<8x128xf32>
    tpu.vector_store %arg8[%c0_41, %c0_42], %138 {strides = array<i32>} : memref<8x128xf32, #tpu.memory_space<vmem>>, vector<8x128xf32>,
    return
  }
  func.func @transform_0(%arg0: i32) -> (i32, i32) {
    %c0_i32 = arith.constant 0 : i32
    %c0_i32_0 = arith.constant 0 : i32
    %c0_i32_1 = arith.constant 0 : i32
    return %c0_i32, %c0_i32_0 : i32, i32
  }
  func.func @transform_1(%arg0: i32) -> (i32, i32) {
    %c0_i32 = arith.constant 0 : i32
    %c0_i32_0 = arith.constant 0 : i32
    return %arg0, %c0_i32 : i32, i32
  }
  func.func @transform_2(%arg0: i32) -> (i32, i32) {
    %c0_i32 = arith.constant 0 : i32
    %c0_i32_0 = arith.constant 0 : i32
    return %arg0, %c0_i32 : i32, i32
  }
  func.func @transform_3(%arg0: i32) -> (i32, i32) {
    %c0_i32 = arith.constant 0 : i32
    %c0_i32_0 = arith.constant 0 : i32
    return %arg0, %c0_i32 : i32, i32
  }
  func.func @transform_4(%arg0: i32) -> (i32, i32) {
    %c0_i32 = arith.constant 0 : i32
    %c0_i32_0 = arith.constant 0 : i32
    %c0_i32_1 = arith.constant 0 : i32
    return %c0_i32, %c0_i32_0 : i32, i32
  }
  func.func @transform_5(%arg0: i32) -> (i32, i32) {
    %c0_i32 = arith.constant 0 : i32
    %c0_i32_0 = arith.constant 0 : i32
    %c0_i32_1 = arith.constant 0 : i32
    return %c0_i32, %c0_i32_0 : i32, i32
  }
  func.func @transform_6(%arg0: i32) -> (i32, i32, i32) {
    %c0_i32 = arith.constant 0 : i32
    %c0_i32_0 = arith.constant 0 : i32
    %c0_i32_1 = arith.constant 0 : i32
    %c0_i32_2 = arith.constant 0 : i32
    return %c0_i32, %c0_i32_0, %c0_i32_1 : i32, i32, i32
  }
  func.func @transform_7(%arg0: i32) -> (i32, i32) {
    %c0_i32 = arith.constant 0 : i32
    %c0_i32_0 = arith.constant 0 : i32
    return %arg0, %c0_i32 : i32, i32
  }
}

</mosaic_0001>

<llo_original>
// kernel: tpu_custom_call.1
$region0: #{tpu_custom_call.1}
  #allocation0 [shape = 'u32[]', space=smem, size = 0x4, offset = 0x4, fixed_abs, tag = 'smem constant byte address 0x4 - core index']
  #allocation1 [shape = 'u32[144,128]{1,0:T(1,128)}', space=vmem, size = 0x12000, scoped, tag = 'internal scratch']
  #allocation2 [shape = 'f32[1,1]{1,0:T(1,128)S(6)}', space=smem, size = 0x200, scoped, tag = 'scoped memory for tpu_custom_call.1']
  %s0 = inlined_call_operand.<no memory space> [shape: f32[1,1], index: 0, kind: input, shape index: {}]
  %s1 = inlined_call_operand.hbm [shape: f32[16,128], index: 1, kind: input, shape index: {}]
  %s2 = inlined_call_operand.hbm [shape: f32[256,128], index: 2, kind: input, shape index: {}]
  %s3 = inlined_call_operand.hbm [shape: f32[16,16], index: 3, kind: input, shape index: {}]
  %s4 = inlined_call_operand.vmem [shape: f32[4,128], index: 4, kind: input, shape index: {}]
  %s5 = inlined_call_operand.vmem [shape: f32[6,128], index: 5, kind: input, shape index: {}]
  %s6 = inlined_call_operand.hbm [shape: bf16[2,128,128], index: 6, kind: input, shape index: {}]
  %s7 = inlined_call_operand.hbm [shape: f32[16,128], index: 7, kind: output, shape index: {}]
  %s8 = sld [smem:[#allocation0]]
  $region77: #{tpu_custom_call.1} parent=0
    _
  %s10 = ssub.s32 1, %s8
  %s11 = scalar_select 0, %s10, %s8
  %12 = sst [smem:[#allocation2]] %s0
  $region1: #{tpu_custom_call.1} parent=0
    #allocation3 [shape = 'u8[8192]{0}', space=vmem, size = 0x2000, scoped, tag = 'input window, operand 1']
    #allocation4 [shape = 's32[2]{0}', space=sflag, size = 0x8, scoped, tag = 'scoped memory for tpu_custom_call.1']
    #allocation5 [shape = 's32[2]{0}', space=sflag, size = 0x8, scoped, tag = 'scoped memory for tpu_custom_call.1']
    #allocation6 [shape = 'u8[131072]{0}', space=vmem, size = 0x20000, scoped, tag = 'input window, operand 2']
    #allocation7 [shape = 's32[2]{0}', space=sflag, size = 0x8, scoped, tag = 'scoped memory for tpu_custom_call.1']
    #allocation8 [shape = 'u8[8192]{0}', space=vmem, size = 0x2000, scoped, tag = 'input window, operand 3']
    #allocation9 [shape = 'u8[65536]{0}', space=vmem, size = 0x10000, scoped, tag = 'input window, operand 6, single buffered']
    #allocation10 [shape = 's32[1]{0}', space=sflag, size = 0x4, scoped, tag = 'scoped memory for tpu_custom_call.1']
    #allocation11 [shape = 'u8[8192]{0}', space=vmem, size = 0x2000, scoped, tag = 'output window, operand 0']
    %13 = vsyncpa [#allocation4], 0
    %s14 = scalar_lea.sflag [#allocation4], 1
    %15 = vsyncpa %s14, 0
    %16 = vsyncpa [#allocation7], 0
    %s17 = scalar_lea.sflag [#allocation7], 1
    %18 = vsyncpa %s17, 0
    %19 = vsyncpa [#allocation10], 0
    %20 = vsyncpa [#allocation5], 0
    %s21 = scalar_lea.sflag [#allocation5], 1
    %22 = vsyncpa %s21, 0
    loop: start=0, step=1, limit=4
    $region2: #{tpu_custom_call.1} parent=1 // loop_pre_header
      _
    $region3: #{tpu_custom_call.1} parent=1 // loop_header
      %s24 = sphi 0, %s28
      %p25 = scmp.ge.s32.totalorder %s24, 4
      %s32 = sphi 0, %s32
      %s34 = sphi 0, %s32
      %s35 = sphi 0, %s34
      %s49 = sphi 0, %s35
      %s55 = sphi 0, %s57
      %s58 = sphi 0, %s55
      %s59 = sphi 0, %s58
      %s75 = sphi 0, %s59
      %s81 = sphi 0, %s83
      %s84 = sphi 0, %s81
      %s85 = sphi 0, %s84
      %s101 = sphi 0, %s85
      %s107 = sphi 0, %s109
      %s110 = sphi 0, %s107
      %s111 = sphi 0, %s110
      %s127 = sphi 0, %s111
      %s131 = sphi 0, %s131
      %s133 = sphi 0, %s131
      %s134 = sphi 0, %s133
      %s148 = sphi 0, %s134
      %s152 = sphi 0, %s152
      %s154 = sphi 0, %s152
      %s155 = sphi 0, %s154
      %s169 = sphi 0, %s155
      %s173 = sphi 0, %s173
      %s175 = sphi 0, %s173
      %s176 = sphi 0, %s175
      %s190 = sphi 0, %s176
      %s196 = sphi 0, %s198
      %s199 = sphi 0, %s196
      %s200 = sphi 0, %s199
      %s216 = sphi 0, %s200
    $region4: #{tpu_custom_call.1} parent=1 // loop_header_branch
      %27 = sbr.rel (%p25) target = $region8
    $region5: #{tpu_custom_call.1} parent=1 // loop_body
      %s29 = ssub.s32 %s24, 1
      %s30 = ssub.s32 %s24, 2
      %s31 = sadd.s32 %s24, 1
      %s33 = sadd.s32 %s32, 1
      %p36 = scmp.eq.s32.totalorder %s24, 1
      %p37 = scmp.ne.s32.totalorder %s32, %s34
      %p38 = scmp.eq.s32.totalorder %s24, 0
      %p39 = por %p37, %p38
      %p40 = scmp.ne.s32.totalorder %s32, %s34
      %p41 = scmp.eq.s32.totalorder %s29, 1
      %p42 = por %p40, %p41
      %p43 = scmp.ne.s32.totalorder %s34, %s35
      %p44 = scmp.eq.s32.totalorder %s29, 0
      %p45 = por %p43, %p44
      %p46 = scmp.ne.s32.totalorder %s34, %s35
      %p47 = scmp.eq.s32.totalorder %s30, 1
      %p48 = por %p46, %p47
      %p50 = scmp.ne.s32.totalorder %s35, %s49
      %p51 = scmp.eq.s32.totalorder %s30, 0
      %p52 = por %p50, %p51
      %s53 = ssub.s32 %s24, %s31
      %p54 = scmp.eq.s32.totalorder %s53, 0
      %s56 = sadd.s32 %s55, 1
      %s57 = scalar_select %p54, %s55, %s56
      %p60 = pneg %p54
      %p61 = scmp.eq.s32.totalorder %s24, 1
      %p62 = por %p60, %p61
      %p63 = scmp.ne.s32.totalorder %s55, %s58
      %p64 = scmp.eq.s32.totalorder %s24, 0
      %p65 = por %p63, %p64
      %p66 = scmp.ne.s32.totalorder %s55, %s58
      %p67 = scmp.eq.s32.totalorder %s29, 1
      %p68 = por %p66, %p67
      %p69 = scmp.ne.s32.totalorder %s58, %s59
      %p70 = scmp.eq.s32.totalorder %s29, 0
      %p71 = por %p69, %p70
      %p72 = scmp.ne.s32.totalorder %s58, %s59
      %p73 = scmp.eq.s32.totalorder %s30, 1
      %p74 = por %p72, %p73
      %p76 = scmp.ne.s32.totalorder %s59, %s75
      %p77 = scmp.eq.s32.totalorder %s30, 0
      %p78 = por %p76, %p77
      %s79 = ssub.s32 %s24, %s31
      %p80 = scmp.eq.s32.totalorder %s79, 0
      %s82 = sadd.s32 %s81, 1
      %s83 = scalar_select %p80, %s81, %s82
      %p86 = pneg %p80
      %p87 = scmp.eq.s32.totalorder %s24, 1
      %p88 = por %p86, %p87
      %p89 = scmp.ne.s32.totalorder %s81, %s84
      %p90 = scmp.eq.s32.totalorder %s24, 0
      %p91 = por %p89, %p90
      %p92 = scmp.ne.s32.totalorder %s81, %s84
      %p93 = scmp.eq.s32.totalorder %s29, 1
      %p94 = por %p92, %p93
      %p95 = scmp.ne.s32.totalorder %s84, %s85
      %p96 = scmp.eq.s32.totalorder %s29, 0
      %p97 = por %p95, %p96
      %p98 = scmp.ne.s32.totalorder %s84, %s85
      %p99 = scmp.eq.s32.totalorder %s30, 1
      %p100 = por %p98, %p99
      %p102 = scmp.ne.s32.totalorder %s85, %s101
      %p103 = scmp.eq.s32.totalorder %s30, 0
      %p104 = por %p102, %p103
      %s105 = ssub.s32 %s24, %s31
      %p106 = scmp.eq.s32.totalorder %s105, 0
      %s108 = sadd.s32 %s107, 1
      %s109 = scalar_select %p106, %s107, %s108
      %p112 = pneg %p106
      %p113 = scmp.eq.s32.totalorder %s24, 1
      %p114 = por %p112, %p113
      %p115 = scmp.ne.s32.totalorder %s107, %s110
      %p116 = scmp.eq.s32.totalorder %s24, 0
      %p117 = por %p115, %p116
      %p118 = scmp.ne.s32.totalorder %s107, %s110
      %p119 = scmp.eq.s32.totalorder %s29, 1
      %p120 = por %p118, %p119
      %p121 = scmp.ne.s32.totalorder %s110, %s111
      %p122 = scmp.eq.s32.totalorder %s29, 0
      %p123 = por %p121, %p122
      %p124 = scmp.ne.s32.totalorder %s110, %s111
      %p125 = scmp.eq.s32.totalorder %s30, 1
      %p126 = por %p124, %p125
      %p128 = scmp.ne.s32.totalorder %s111, %s127
      %p129 = scmp.eq.s32.totalorder %s30, 0
      %p130 = por %p128, %p129
      %s132 = sadd.s32 %s131, 1
      %p135 = scmp.eq.s32.totalorder %s24, 1
      %p136 = scmp.ne.s32.totalorder %s131, %s133
      %p137 = scmp.eq.s32.totalorder %s24, 0
      %p138 = por %p136, %p137
      %p139 = scmp.ne.s32.totalorder %s131, %s133
      %p140 = scmp.eq.s32.totalorder %s29, 1
      %p141 = por %p139, %p140
      %p142 = scmp.ne.s32.totalorder %s133, %s134
      %p143 = scmp.eq.s32.totalorder %s29, 0
      %p144 = por %p142, %p143
      %p145 = scmp.ne.s32.totalorder %s133, %s134
      %p146 = scmp.eq.s32.totalorder %s30, 1
      %p147 = por %p145, %p146
      %p149 = scmp.ne.s32.totalorder %s134, %s148
      %p150 = scmp.eq.s32.totalorder %s30, 0
      %p151 = por %p149, %p150
      %s153 = sadd.s32 %s152, 1
      %p156 = scmp.eq.s32.totalorder %s24, 1
      %p157 = scmp.ne.s32.totalorder %s152, %s154
      %p158 = scmp.eq.s32.totalorder %s24, 0
      %p159 = por %p157, %p158
      %p160 = scmp.ne.s32.totalorder %s152, %s154
      %p161 = scmp.eq.s32.totalorder %s29, 1
      %p162 = por %p160, %p161
      %p163 = scmp.ne.s32.totalorder %s154, %s155
      %p164 = scmp.eq.s32.totalorder %s29, 0
      %p165 = por %p163, %p164
      %p166 = scmp.ne.s32.totalorder %s154, %s155
      %p167 = scmp.eq.s32.totalorder %s30, 1
      %p168 = por %p166, %p167
      %p170 = scmp.ne.s32.totalorder %s155, %s169
      %p171 = scmp.eq.s32.totalorder %s30, 0
      %p172 = por %p170, %p171
      %s174 = sadd.s32 %s173, 1
      %p177 = scmp.eq.s32.totalorder %s24, 1
      %p178 = scmp.ne.s32.totalorder %s173, %s175
      %p179 = scmp.eq.s32.totalorder %s24, 0
      %p180 = por %p178, %p179
      %p181 = scmp.ne.s32.totalorder %s173, %s175
      %p182 = scmp.eq.s32.totalorder %s29, 1
      %p183 = por %p181, %p182
      %p184 = scmp.ne.s32.totalorder %s175, %s176
      %p185 = scmp.eq.s32.totalorder %s29, 0
      %p186 = por %p184, %p185
      %p187 = scmp.ne.s32.totalorder %s175, %s176
      %p188 = scmp.eq.s32.totalorder %s30, 1
      %p189 = por %p187, %p188
      %p191 = scmp.ne.s32.totalorder %s176, %s190
      %p192 = scmp.eq.s32.totalorder %s30, 0
      %p193 = por %p191, %p192
      %s194 = ssub.s32 %s24, %s31
      %p195 = scmp.eq.s32.totalorder %s194, 0
      %s197 = sadd.s32 %s196, 1
      %s198 = scalar_select %p195, %s196, %s197
      %p201 = pneg %p195
      %p202 = scmp.eq.s32.totalorder %s24, 1
      %p203 = por %p201, %p202
      %p204 = scmp.ne.s32.totalorder %s196, %s199
      %p205 = scmp.eq.s32.totalorder %s24, 0
      %p206 = por %p204, %p205
      %p207 = scmp.ne.s32.totalorder %s196, %s199
      %p208 = scmp.eq.s32.totalorder %s29, 1
      %p209 = por %p207, %p208
      %p210 = scmp.ne.s32.totalorder %s199, %s200
      %p211 = scmp.eq.s32.totalorder %s29, 0
      %p212 = por %p210, %p211
      %p213 = scmp.ne.s32.totalorder %s199, %s200
      %p214 = scmp.eq.s32.totalorder %s30, 1
      %p215 = por %p213, %p214
      %p217 = scmp.ne.s32.totalorder %s200, %s216
      %p218 = scmp.eq.s32.totalorder %s30, 0
      %p219 = por %p217, %p218
      %p220 = scmp.le.s32.totalorder 1, %s24
      %p221 = scmp.lt.s32.totalorder %s24, 3
      %p222 = pnand %p220, %p221
      %p223 = pneg %p222
      // Predicated region
      $region9: #{tpu_custom_call.1} parent=5 // pred_check
        _
      $region10: #{tpu_custom_call.1} parent=5 // pred_check_branch
        %225 = sbr.rel (%p222) target = $region12
      $region11: #{tpu_custom_call.1} parent=5 // pred_region
        %s226 = ssub.s32 %s24, 1
        // Predicated region
        $region13: #{tpu_custom_call.1} parent=11 // pred_check
          %p227 = pneg %p45
        $region14: #{tpu_custom_call.1} parent=11 // pred_check_branch
          %229 = sbr.rel (%p227) target = $region16
        $region15: #{tpu_custom_call.1} parent=11 // pred_region
          _
        $region16: #{tpu_custom_call.1} parent=11 // pred_fallthru
          _
        // Predicated region
        $region17: #{tpu_custom_call.1} parent=11 // pred_check
          %p230 = pneg %p144
        $region18: #{tpu_custom_call.1} parent=11 // pred_check_branch
          %232 = sbr.rel (%p230) target = $region20
        $region19: #{tpu_custom_call.1} parent=11 // pred_region
          _
        $region20: #{tpu_custom_call.1} parent=11 // pred_fallthru
          _
        // Predicated region
        $region21: #{tpu_custom_call.1} parent=11 // pred_check
          %p233 = pneg %p165
        $region22: #{tpu_custom_call.1} parent=11 // pred_check_branch
          %235 = sbr.rel (%p233) target = $region24
        $region23: #{tpu_custom_call.1} parent=11 // pred_region
          _
        $region24: #{tpu_custom_call.1} parent=11 // pred_fallthru
          _
        // Predicated region
        $region25: #{tpu_custom_call.1} parent=11 // pred_check
          %p236 = pneg %p186
        $region26: #{tpu_custom_call.1} parent=11 // pred_check_branch
          %238 = sbr.rel (%p236) target = $region28
        $region27: #{tpu_custom_call.1} parent=11 // pred_region
          %s240 = ssub.s32 2048, 2048
          %241 = vsyncadd [#allocation10], %s240
          %s242 = sshll.u32 [#allocation9], 4
          %s243 = int_to_ptr.vmem [resolvable:$true] %s242
          %248 = dma.hbm_to_vmem [thread:$0]  %s6, 2048, %s243, [#allocation10], 64, 64, 4
        $region28: #{tpu_custom_call.1} parent=11 // pred_fallthru
          _
      $region12: #{tpu_custom_call.1} parent=5 // pred_fallthru
        _
      %p249 = scmp.lt.s32.totalorder %s24, 2
      // Predicated region
      $region29: #{tpu_custom_call.1} parent=5 // pred_check
        %p250 = pneg %p249
      $region30: #{tpu_custom_call.1} parent=5 // pred_check_branch
        %252 = sbr.rel (%p250) target = $region32
      $region31: #{tpu_custom_call.1} parent=5 // pred_region
        // Predicated region
        $region33: #{tpu_custom_call.1} parent=31 // pred_check
          %p253 = pneg %p65
        $region34: #{tpu_custom_call.1} parent=31 // pred_check_branch
          %255 = sbr.rel (%p253) target = $region36
        $region35: #{tpu_custom_call.1} parent=31 // pred_region
          %s256 = sand.u32 %s55, 1
          %s257 = scalar_lea.sflag [#allocation4], %s256
          %s258 = sand.u32 %s55, 1
          %s259 = smul.addr %s258, 8
          %s260 = scalar_lea.vmem [#allocation3], %s259
          %s262 = ssub.s32 128, 128
          %263 = vsyncadd %s257, %s262
          %s264 = smul.addr %s24, 128
          %s265 = scalar_lea.hbm %s1, %s264
          %s267 = sshll.u32 %s260, 4
          %s268 = int_to_ptr.vmem [resolvable:$true] %s267
          %270 = dma.hbm_to_vmem [thread:$0]  %s265, 128, %s268, %s257
        $region36: #{tpu_custom_call.1} parent=31 // pred_fallthru
          _
        // Predicated region
        $region37: #{tpu_custom_call.1} parent=31 // pred_check
          %p271 = pneg %p91
        $region38: #{tpu_custom_call.1} parent=31 // pred_check_branch
          %273 = sbr.rel (%p271) target = $region40
        $region39: #{tpu_custom_call.1} parent=31 // pred_region
          %s274 = sand.u32 %s24, 1
          %s275 = scalar_lea.sflag [#allocation7], %s274
          %s276 = sand.u32 %s81, 1
          %s277 = smul.addr %s276, 128
          %s278 = scalar_lea.vmem [#allocation6], %s277
          %s279 = smul.u32 16, %s24
          %s281 = ssub.s32 2048, 2048
          %282 = vsyncadd %s275, %s281
          %s283 = smul.addr %s279, 128
          %s284 = scalar_lea.hbm %s2, %s283
          %s285 = sshll.u32 %s278, 4
          %s286 = int_to_ptr.vmem [resolvable:$true] %s285
          %291 = dma.hbm_to_vmem [thread:$0]  %s284, 2048, %s286, %s275, 128, 128, 8
        $region40: #{tpu_custom_call.1} parent=31 // pred_fallthru
          _
        // Predicated region
        $region41: #{tpu_custom_call.1} parent=31 // pred_check
          %p292 = pneg %p117
        $region42: #{tpu_custom_call.1} parent=31 // pred_check_branch
          %294 = sbr.rel (%p292) target = $region44
        $region43: #{tpu_custom_call.1} parent=31 // pred_region
          %s295 = sand.u32 %s24, 1
          %s296 = scalar_lea.sflag [#allocation7], %s295
          %s297 = sand.u32 %s107, 1
          %s298 = smul.addr %s297, 8
          %s299 = scalar_lea.vmem [#allocation8], %s298
          %s301 = ssub.s32 128, 128
          %302 = vsyncadd %s296, %s301
          %s303 = smul.addr %s24, 128
          %s304 = scalar_lea.hbm %s3, %s303
          %s306 = sshll.u32 %s299, 4
          %s307 = int_to_ptr.vmem [resolvable:$true] %s306
          %309 = dma.hbm_to_vmem [thread:$0]  %s304, 128, %s307, %s296
        $region44: #{tpu_custom_call.1} parent=31 // pred_fallthru
          _
      $region32: #{tpu_custom_call.1} parent=5 // pred_fallthru
        _
      %p310 = scmp.le.s32.totalorder 1, %s24
      %p311 = scmp.lt.s32.totalorder %s24, 3
      %p312 = pnand %p310, %p311
      %p313 = pneg %p312
      // Predicated region
      $region45: #{tpu_custom_call.1} parent=5 // pred_check
        _
      $region46: #{tpu_custom_call.1} parent=5 // pred_check_branch
        %315 = sbr.rel (%p312) target = $region48
      $region47: #{tpu_custom_call.1} parent=5 // pred_region
        %s316 = ssub.s32 %s24, 1
        %s317 = sand.u32 %s58, 1
        %s318 = scalar_lea.sflag [#allocation4], %s317
        %s319 = sand.u32 %s58, 1
        %s320 = smul.addr %s319, 8
        %s321 = scalar_lea.vmem [#allocation3], %s320
        // Predicated region
        $region49: #{tpu_custom_call.1} parent=47 // pred_check
          %p322 = pneg %p71
        $region50: #{tpu_custom_call.1} parent=47 // pred_check_branch
          %324 = sbr.rel (%p322) target = $region52
        $region51: #{tpu_custom_call.1} parent=47 // pred_region
          %325 = dma.done %s318, 128
        $region52: #{tpu_custom_call.1} parent=47 // pred_fallthru
          _
        %s326 = sand.u32 %s29, 1
        %s327 = scalar_lea.sflag [#allocation7], %s326
        %s328 = sand.u32 %s84, 1
        %s329 = smul.addr %s328, 128
        %s330 = scalar_lea.vmem [#allocation6], %s329
        // Predicated region
        $region53: #{tpu_custom_call.1} parent=47 // pred_check
          %p331 = pneg %p97
        $region54: #{tpu_custom_call.1} parent=47 // pred_check_branch
          %333 = sbr.rel (%p331) target = $region56
        $region55: #{tpu_custom_call.1} parent=47 // pred_region
          %334 = dma.done %s327, 2048
        $region56: #{tpu_custom_call.1} parent=47 // pred_fallthru
          _
        %s335 = sand.u32 %s29, 1
        %s336 = scalar_lea.sflag [#allocation7], %s335
        %s337 = sand.u32 %s110, 1
        %s338 = smul.addr %s337, 8
        %s339 = scalar_lea.vmem [#allocation8], %s338
        // Predicated region
        $region57: #{tpu_custom_call.1} parent=47 // pred_check
          %p340 = pneg %p123
        $region58: #{tpu_custom_call.1} parent=47 // pred_check_branch
          %342 = sbr.rel (%p340) target = $region60
        $region59: #{tpu_custom_call.1} parent=47 // pred_region
          %343 = dma.done %s336, 128
        $region60: #{tpu_custom_call.1} parent=47 // pred_fallthru
          _
        // Predicated region
        $region61: #{tpu_custom_call.1} parent=47 // pred_check
          %p344 = pneg %p186
        $region62: #{tpu_custom_call.1} parent=47 // pred_check_branch
          %346 = sbr.rel (%p344) target = $region64
        $region63: #{tpu_custom_call.1} parent=47 // pred_region
          %347 = dma.done [#allocation10], 2048
        $region64: #{tpu_custom_call.1} parent=47 // pred_fallthru
          _
        %p348 = pneg %p45
        %p349 = pneg %p42
        %s350 = sand.u32 %s58, 1
        %s351 = scalar_lea.sflag [#allocation4], %s350
        %s352 = sand.u32 %s58, 1
        %s353 = smul.addr %s352, 8
        %s354 = scalar_lea.vmem [#allocation3], %s353
        %p355 = pneg %p71
        %p356 = pneg %p68
        %s357 = sand.u32 %s29, 1
        %s358 = scalar_lea.sflag [#allocation7], %s357
        %s359 = sand.u32 %s84, 1
        %s360 = smul.addr %s359, 128
        %s361 = scalar_lea.vmem [#allocation6], %s360
        %p362 = pneg %p97
        %p363 = pneg %p94
        %s364 = sand.u32 %s29, 1
        %s365 = scalar_lea.sflag [#allocation7], %s364
        %s366 = sand.u32 %s110, 1
        %s367 = smul.addr %s366, 8
        %s368 = scalar_lea.vmem [#allocation8], %s367
        %p369 = pneg %p123
        %p370 = pneg %p120
        %p371 = pneg %p144
        %p372 = pneg %p141
        %p373 = pneg %p165
        %p374 = pneg %p162
        %p375 = pneg %p186
        %p376 = pneg %p183
        %p377 = pneg %p212
        %p378 = pneg %p209
        %s379 = sand.u32 %s199, 1
        %s380 = scalar_lea.sflag [#allocation5], %s379
        %s381 = sand.u32 %s199, 1
        %s382 = smul.addr %s381, 8
        %s383 = scalar_lea.vmem [#allocation11], %s382
        %s384 = smul.u32 16, %s29
        %s386 = sld [smem:[#allocation2]]
        %v387 = vld [vmem:[%s4] sm:$0xf]
        %v388 = vld [vmem:[%s5] sm:$0x3f]
        %v389 = vld [vmem:[%s321] sm:$0xff]
        %390 = vadd.xlane.f32.xlu0 %v389
        %v391 = vpop.xlane.xlu0 %390
        %v392 = vrcp.pop 128.0
        %v393 = vmul.f32 %v391, %v392
        %v394 = vmul.f32 %v389, %v389
        %395 = vadd.xlane.f32.xlu0 %v394
        %v396 = vpop.xlane.xlu0 %395
        %v397 = vmul.f32 %v396, %v392
        %v398 = vmul.f32 %v393, %v393
        %v399 = vsub.f32 %v397, %v398
        %v400 = vadd.f32 %v399, 1e-05
        %v401 = vrsqrt.pop %v400
        %v402 = vsub.f32 %v389, %v393
        %v403 = vlaneseq
        %v404 = vshrl.u32 %v403, 7
        %v405 = vsub.s32 0, %v404
        %v406 = vrot.slane %v387, %v405
        %v407 = vmul.f32 %v406, %v401
        %v408 = vmul.f32 %v402, %v407
        %v409 = vlaneseq
        %v410 = vshrl.u32 %v409, 7
        %v411 = vsub.s32 1, %v410
        %v412 = vrot.slane %v387, %v411
        %v413 = vadd.f32 %v408, %v412
        %v414 = vpack.c.bf16 %v413, %v413
        %v415 = vld [vmem:[#allocation9] sm:$0xf]
        %v416 = vld [vmem:[#allocation9 + $0x4] sm:$0xf]
        %v417 = vld [vmem:[#allocation9 + $0x8] sm:$0xf]
        %v418 = vld [vmem:[#allocation9 + $0xc] sm:$0xf]
        %v419 = vld [vmem:[#allocation9 + $0x10] sm:$0xf]
        %v420 = vld [vmem:[#allocation9 + $0x14] sm:$0xf]
        %v421 = vld [vmem:[#allocation9 + $0x18] sm:$0xf]
        %v422 = vld [vmem:[#allocation9 + $0x1c] sm:$0xf]
        %v423 = vld [vmem:[#allocation9 + $0x20] sm:$0xf]
        %v424 = vld [vmem:[#allocation9 + $0x24] sm:$0xf]
        %v425 = vld [vmem:[#allocation9 + $0x28] sm:$0xf]
        %v426 = vld [vmem:[#allocation9 + $0x2c] sm:$0xf]
        %v427 = vld [vmem:[#allocation9 + $0x30] sm:$0xf]
        %v428 = vld [vmem:[#allocation9 + $0x34] sm:$0xf]
        %v429 = vld [vmem:[#allocation9 + $0x38] sm:$0xf]
        %v430 = vld [vmem:[#allocation9 + $0x3c] sm:$0xf]
        %v431 = vlaneseq
        %v432 = vshrl.u32 %v431, 7
        %v433 = vsub.s32 0, %v432
        %v434 = vrot.slane %v388, %v433
        %v451 = vunpack.c.l.b16 %v415
        %v452 = vunpack.c.l.b16 %v416
        %v453 = vunpack.c.l.b16 %v417
        %v454 = vunpack.c.l.b16 %v418
        %v455 = vunpack.c.l.b16 %v419
        %v456 = vunpack.c.l.b16 %v420
        %v457 = vunpack.c.l.b16 %v421
        %v458 = vunpack.c.l.b16 %v422
        %v459 = vunpack.c.l.b16 %v423
        %v460 = vunpack.c.l.b16 %v424
        %v461 = vunpack.c.l.b16 %v425
        %v462 = vunpack.c.l.b16 %v426
        %v463 = vunpack.c.l.b16 %v427
        %v464 = vunpack.c.l.b16 %v428
        %v465 = vunpack.c.l.b16 %v429
        %v466 = vunpack.c.l.b16 %v430
        %v467 = vpack.c.b16 %v452, %v451
        %v468 = vpack.c.b16 %v454, %v453
        %v469 = vpack.c.b16 %v456, %v455
        %v470 = vpack.c.b16 %v458, %v457
        %v471 = vpack.c.b16 %v460, %v459
        %v472 = vpack.c.b16 %v462, %v461
        %v473 = vpack.c.b16 %v464, %v463
        %v474 = vpack.c.b16 %v466, %v465
        %483 = vmatprep.subr.bf16.mxu0 0
        %484 = vmatpush1.bf16.msra.mxu0 %v467
        %485 = vmatprep.subr.bf16.mxu0 0
        %486 = vmatpush1.bf16.msra.mxu0 %v468
        %487 = vmatprep.subr.bf16.mxu0 0
        %488 = vmatpush1.bf16.msra.mxu0 %v469
        %489 = vmatprep.subr.bf16.mxu0 0
        %490 = vmatpush1.bf16.msra.mxu0 %v470
        %491 = vmatprep.subr.bf16.mxu0 0
        %492 = vmatpush1.bf16.msra.mxu0 %v471
        %493 = vmatprep.subr.bf16.mxu0 0
        %494 = vmatpush1.bf16.msra.mxu0 %v472
        %495 = vmatprep.subr.bf16.mxu0 0
        %496 = vmatpush1.bf16.msra.mxu0 %v473
        %497 = vmatprep.subr.bf16.mxu0 0
        %498 = vmatpush1.bf16.msra.mxu0 %v474
        %499 = vmatprep.subr.bf16.mxu0 0
        %500 = vmatpush1.bf16.msra.mxu0 0
        %501 = vmatprep.subr.bf16.mxu0 0
        %502 = vmatpush1.bf16.msra.mxu0 0
        %503 = vmatprep.subr.bf16.mxu0 0
        %504 = vmatpush1.bf16.msra.mxu0 0
        %505 = vmatprep.subr.bf16.mxu0 0
        %506 = vmatpush1.bf16.msra.mxu0 0
        %507 = vmatprep.subr.bf16.mxu0 0
        %508 = vmatpush1.bf16.msra.mxu0 0
        %509 = vmatprep.subr.bf16.mxu0 0
        %510 = vmatpush1.bf16.msra.mxu0 0
        %511 = vmatprep.subr.bf16.mxu0 0
        %512 = vmatpush1.bf16.msra.mxu0 0
        %513 = vmatprep.subr.bf16.mxu0 0
        %514 = vmatpush1.bf16.msra.mxu0 0
        %515 = vmatprep.mubr.bf16.mxu0 0
        %516 = vmatmul.mubr.bf16.gmra.mrb[0].mxu0 %v414
        %v517 = vpop.f32.mrb[0].mxu0
        %v518 = vadd.f32 %v434, %v517
        %v519 = vpop.f32.mrb[0].mxu0
        %v520 = vpop.f32.mrb[0].mxu0
        %v521 = vpop.f32.mrb[0].mxu0
        %522 = vdwg.mxu0
        %v523 = vstv %s386
        %v524 = vmul.f32 %v388, %v523
        %525 = vadd.xlane.f32.xlu0 %v518
        %v526 = vpop.xlane.xlu0 %525
        %v527 = vmul.f32 %v526, %v392
        %v528 = vmul.f32 %v518, %v518
        %529 = vadd.xlane.f32.xlu0 %v528
        %v530 = vpop.xlane.xlu0 %529
        %v531 = vmul.f32 %v530, %v392
        %v532 = vmul.f32 %v527, %v527
        %v533 = vsub.f32 %v531, %v532
        %v534 = vadd.f32 %v533, 1e-05
        %v535 = vrsqrt.pop %v534
        %v536 = vsub.f32 %v518, %v527
        %v537 = vlaneseq
        %v538 = vshrl.u32 %v537, 7
        %v539 = vsub.s32 1, %v538
        %v540 = vrot.slane %v524, %v539
        %v541 = vmul.f32 %v540, %v535
        %v542 = vmul.f32 %v536, %v541
        %v543 = vlaneseq
        %v544 = vshrl.u32 %v543, 7
        %v545 = vsub.s32 2, %v544
        %v546 = vrot.slane %v524, %v545
        %v547 = vadd.f32 %v542, %v546
        %v548 = vld [vmem:[%s330] sm:$0xff]
        %v549 = vld [vmem:[%s330 + $0x8] sm:$0xff]
        %v550 = vld [vmem:[%s330 + $0x10] sm:$0xff]
        %v551 = vld [vmem:[%s330 + $0x18] sm:$0xff]
        %v552 = vld [vmem:[%s330 + $0x20] sm:$0xff]
        %v553 = vld [vmem:[%s330 + $0x28] sm:$0xff]
        %v554 = vld [vmem:[%s330 + $0x30] sm:$0xff]
        %v555 = vld [vmem:[%s330 + $0x38] sm:$0xff]
        %v556 = vld [vmem:[%s330 + $0x40] sm:$0xff]
        %v557 = vld [vmem:[%s330 + $0x48] sm:$0xff]
        %v558 = vld [vmem:[%s330 + $0x50] sm:$0xff]
        %v559 = vld [vmem:[%s330 + $0x58] sm:$0xff]
        %v560 = vld [vmem:[%s330 + $0x60] sm:$0xff]
        %v561 = vld [vmem:[%s330 + $0x68] sm:$0xff]
        %v562 = vld [vmem:[%s330 + $0x70] sm:$0xff]
        %v563 = vld [vmem:[%s330 + $0x78] sm:$0xff]
        %564 = vadd.xlane.f32.xlu0 %v548
        %v565 = vpop.xlane.xlu0 %564
        %566 = vadd.xlane.f32.xlu0 %v549
        %v567 = vpop.xlane.xlu0 %566
        %568 = vadd.xlane.f32.xlu0 %v550
        %v569 = vpop.xlane.xlu0 %568
        %570 = vadd.xlane.f32.xlu0 %v551
        %v571 = vpop.xlane.xlu0 %570
        %572 = vadd.xlane.f32.xlu0 %v552
        %v573 = vpop.xlane.xlu0 %572
        %574 = vadd.xlane.f32.xlu0 %v553
        %v575 = vpop.xlane.xlu0 %574
        %576 = vadd.xlane.f32.xlu0 %v554
        %v577 = vpop.xlane.xlu0 %576
        %578 = vadd.xlane.f32.xlu0 %v555
        %v579 = vpop.xlane.xlu0 %578
        %580 = vadd.xlane.f32.xlu0 %v556
        %v581 = vpop.xlane.xlu0 %580
        %582 = vadd.xlane.f32.xlu0 %v557
        %v583 = vpop.xlane.xlu0 %582
        %584 = vadd.xlane.f32.xlu0 %v558
        %v585 = vpop.xlane.xlu0 %584
        %586 = vadd.xlane.f32.xlu0 %v559
        %v587 = vpop.xlane.xlu0 %586
        %588 = vadd.xlane.f32.xlu0 %v560
        %v589 = vpop.xlane.xlu0 %588
        %590 = vadd.xlane.f32.xlu0 %v561
        %v591 = vpop.xlane.xlu0 %590
        %592 = vadd.xlane.f32.xlu0 %v562
        %v593 = vpop.xlane.xlu0 %592
        %594 = vadd.xlane.f32.xlu0 %v563
        %v595 = vpop.xlane.xlu0 %594
        %v596 = vmul.f32 %v565, %v392
        %v597 = vmul.f32 %v567, %v392
        %v598 = vmul.f32 %v569, %v392
        %v599 = vmul.f32 %v571, %v392
        %v600 = vmul.f32 %v573, %v392
        %v601 = vmul.f32 %v575, %v392
        %v602 = vmul.f32 %v577, %v392
        %v603 = vmul.f32 %v579, %v392
        %v604 = vmul.f32 %v581, %v392
        %v605 = vmul.f32 %v583, %v392
        %v606 = vmul.f32 %v585, %v392
        %v607 = vmul.f32 %v587, %v392
        %v608 = vmul.f32 %v589, %v392
        %v609 = vmul.f32 %v591, %v392
        %v610 = vmul.f32 %v593, %v392
        %v611 = vmul.f32 %v595, %v392
        %v612 = vmul.f32 %v548, %v548
        %v613 = vmul.f32 %v549, %v549
        %v614 = vmul.f32 %v550, %v550
        %v615 = vmul.f32 %v551, %v551
        %v616 = vmul.f32 %v552, %v552
        %v617 = vmul.f32 %v553, %v553
        %v618 = vmul.f32 %v554, %v554
        %v619 = vmul.f32 %v555, %v555
        %v620 = vmul.f32 %v556, %v556
        %v621 = vmul.f32 %v557, %v557
        %v622 = vmul.f32 %v558, %v558
        %v623 = vmul.f32 %v559, %v559
        %v624 = vmul.f32 %v560, %v560
        %v625 = vmul.f32 %v561, %v561
        %v626 = vmul.f32 %v562, %v562
        %v627 = vmul.f32 %v563, %v563
        %628 = vadd.xlane.f32.xlu0 %v612
        %v629 = vpop.xlane.xlu0 %628
        %630 = vadd.xlane.f32.xlu0 %v613
        %v631 = vpop.xlane.xlu0 %630
        %632 = vadd.xlane.f32.xlu0 %v614
        %v633 = vpop.xlane.xlu0 %632
        %634 = vadd.xlane.f32.xlu0 %v615
        %v635 = vpop.xlane.xlu0 %634
        %636 = vadd.xlane.f32.xlu0 %v616
        %v637 = vpop.xlane.xlu0 %636
        %638 = vadd.xlane.f32.xlu0 %v617
        %v639 = vpop.xlane.xlu0 %638
        %640 = vadd.xlane.f32.xlu0 %v618
        %v641 = vpop.xlane.xlu0 %640
        %642 = vadd.xlane.f32.xlu0 %v619
        %v643 = vpop.xlane.xlu0 %642
        %644 = vadd.xlane.f32.xlu0 %v620
        %v645 = vpop.xlane.xlu0 %644
        %646 = vadd.xlane.f32.xlu0 %v621
        %v647 = vpop.xlane.xlu0 %646
        %648 = vadd.xlane.f32.xlu0 %v622
        %v649 = vpop.xlane.xlu0 %648
        %650 = vadd.xlane.f32.xlu0 %v623
        %v651 = vpop.xlane.xlu0 %650
        %652 = vadd.xlane.f32.xlu0 %v624
        %v653 = vpop.xlane.xlu0 %652
        %654 = vadd.xlane.f32.xlu0 %v625
        %v655 = vpop.xlane.xlu0 %654
        %656 = vadd.xlane.f32.xlu0 %v626
        %v657 = vpop.xlane.xlu0 %656
        %658 = vadd.xlane.f32.xlu0 %v627
        %v659 = vpop.xlane.xlu0 %658
        %v660 = vmul.f32 %v629, %v392
        %v661 = vmul.f32 %v631, %v392
        %v662 = vmul.f32 %v633, %v392
        %v663 = vmul.f32 %v635, %v392
        %v664 = vmul.f32 %v637, %v392
        %v665 = vmul.f32 %v639, %v392
        %v666 = vmul.f32 %v641, %v392
        %v667 = vmul.f32 %v643, %v392
        %v668 = vmul.f32 %v645, %v392
        %v669 = vmul.f32 %v647, %v392
        %v670 = vmul.f32 %v649, %v392
        %v671 = vmul.f32 %v651, %v392
        %v672 = vmul.f32 %v653, %v392
        %v673 = vmul.f32 %v655, %v392
        %v674 = vmul.f32 %v657, %v392
        %v675 = vmul.f32 %v659, %v392
        %v676 = vmul.f32 %v596, %v596
        %v677 = vmul.f32 %v597, %v597
        %v678 = vmul.f32 %v598, %v598
        %v679 = vmul.f32 %v599, %v599
        %v680 = vmul.f32 %v600, %v600
        %v681 = vmul.f32 %v601, %v601
        %v682 = vmul.f32 %v602, %v602
        %v683 = vmul.f32 %v603, %v603
        %v684 = vmul.f32 %v604, %v604
        %v685 = vmul.f32 %v605, %v605
        %v686 = vmul.f32 %v606, %v606
        %v687 = vmul.f32 %v607, %v607
        %v688 = vmul.f32 %v608, %v608
        %v689 = vmul.f32 %v609, %v609
        %v690 = vmul.f32 %v610, %v610
        %v691 = vmul.f32 %v611, %v611
        %v692 = vsub.f32 %v660, %v676
        %v693 = vsub.f32 %v661, %v677
        %v694 = vsub.f32 %v662, %v678
        %v695 = vsub.f32 %v663, %v679
        %v696 = vsub.f32 %v664, %v680
        %v697 = vsub.f32 %v665, %v681
        %v698 = vsub.f32 %v666, %v682
        %v699 = vsub.f32 %v667, %v683
        %v700 = vsub.f32 %v668, %v684
        %v701 = vsub.f32 %v669, %v685
        %v702 = vsub.f32 %v670, %v686
        %v703 = vsub.f32 %v671, %v687
        %v704 = vsub.f32 %v672, %v688
        %v705 = vsub.f32 %v673, %v689
        %v706 = vsub.f32 %v674, %v690
        %v707 = vsub.f32 %v675, %v691
        %v708 = vadd.f32 %v692, 1e-05
        %v709 = vadd.f32 %v693, 1e-05
        %v710 = vadd.f32 %v694, 1e-05
        %v711 = vadd.f32 %v695, 1e-05
        %v712 = vadd.f32 %v696, 1e-05
        %v713 = vadd.f32 %v697, 1e-05
        %v714 = vadd.f32 %v698, 1e-05
        %v715 = vadd.f32 %v699, 1e-05
        %v716 = vadd.f32 %v700, 1e-05
        %v717 = vadd.f32 %v701, 1e-05
        %v718 = vadd.f32 %v702, 1e-05
        %v719 = vadd.f32 %v703, 1e-05
        %v720 = vadd.f32 %v704, 1e-05
        %v721 = vadd.f32 %v705, 1e-05
        %v722 = vadd.f32 %v706, 1e-05
        %v723 = vadd.f32 %v707, 1e-05
        %v724 = vrsqrt.pop %v708
        %v725 = vrsqrt.pop %v709
        %v726 = vrsqrt.pop %v710
        %v727 = vrsqrt.pop %v711
        %v728 = vrsqrt.pop %v712
        %v729 = vrsqrt.pop %v713
        %v730 = vrsqrt.pop %v714
        %v731 = vrsqrt.pop %v715
        %v732 = vrsqrt.pop %v716
        %v733 = vrsqrt.pop %v717
        %v734 = vrsqrt.pop %v718
        %v735 = vrsqrt.pop %v719
        %v736 = vrsqrt.pop %v720
        %v737 = vrsqrt.pop %v721
        %v738 = vrsqrt.pop %v722
        %v739 = vrsqrt.pop %v723
        %v740 = vsub.f32 %v548, %v596
        %v741 = vsub.f32 %v549, %v597
        %v742 = vsub.f32 %v550, %v598
        %v743 = vsub.f32 %v551, %v599
        %v744 = vsub.f32 %v552, %v600
        %v745 = vsub.f32 %v553, %v601
        %v746 = vsub.f32 %v554, %v602
        %v747 = vsub.f32 %v555, %v603
        %v748 = vsub.f32 %v556, %v604
        %v749 = vsub.f32 %v557, %v605
        %v750 = vsub.f32 %v558, %v606
        %v751 = vsub.f32 %v559, %v607
        %v752 = vsub.f32 %v560, %v608
        %v753 = vsub.f32 %v561, %v609
        %v754 = vsub.f32 %v562, %v610
        %v755 = vsub.f32 %v563, %v611
        %v756 = vlaneseq
        %v757 = vshrl.u32 %v756, 7
        %v758 = vsub.s32 2, %v757
        %v759 = vrot.slane %v387, %v758
        %v760 = vmul.f32 %v759, %v724
        %v761 = vmul.f32 %v759, %v725
        %v762 = vmul.f32 %v759, %v726
        %v763 = vmul.f32 %v759, %v727
        %v764 = vmul.f32 %v759, %v728
        %v765 = vmul.f32 %v759, %v729
        %v766 = vmul.f32 %v759, %v730
        %v767 = vmul.f32 %v759, %v731
        %v768 = vmul.f32 %v759, %v732
        %v769 = vmul.f32 %v759, %v733
        %v770 = vmul.f32 %v759, %v734
        %v771 = vmul.f32 %v759, %v735
        %v772 = vmul.f32 %v759, %v736
        %v773 = vmul.f32 %v759, %v737
        %v774 = vmul.f32 %v759, %v738
        %v775 = vmul.f32 %v759, %v739
        %v776 = vmul.f32 %v740, %v760
        %v777 = vmul.f32 %v741, %v761
        %v778 = vmul.f32 %v742, %v762
        %v779 = vmul.f32 %v743, %v763
        %v780 = vmul.f32 %v744, %v764
        %v781 = vmul.f32 %v745, %v765
        %v782 = vmul.f32 %v746, %v766
        %v783 = vmul.f32 %v747, %v767
        %v784 = vmul.f32 %v748, %v768
        %v785 = vmul.f32 %v749, %v769
        %v786 = vmul.f32 %v750, %v770
        %v787 = vmul.f32 %v751, %v771
        %v788 = vmul.f32 %v752, %v772
        %v789 = vmul.f32 %v753, %v773
        %v790 = vmul.f32 %v754, %v774
        %v791 = vmul.f32 %v755, %v775
        %v792 = vlaneseq
        %v793 = vshrl.u32 %v792, 7
        %v794 = vsub.s32 3, %v793
        %v795 = vrot.slane %v387, %v794
        %v796 = vadd.f32 %v776, %v795
        %v797 = vadd.f32 %v777, %v795
        %v798 = vadd.f32 %v778, %v795
        %v799 = vadd.f32 %v779, %v795
        %v800 = vadd.f32 %v780, %v795
        %v801 = vadd.f32 %v781, %v795
        %v802 = vadd.f32 %v782, %v795
        %v803 = vadd.f32 %v783, %v795
        %v804 = vadd.f32 %v784, %v795
        %v805 = vadd.f32 %v785, %v795
        %v806 = vadd.f32 %v786, %v795
        %v807 = vadd.f32 %v787, %v795
        %v808 = vadd.f32 %v788, %v795
        %v809 = vadd.f32 %v789, %v795
        %v810 = vadd.f32 %v790, %v795
        %v811 = vadd.f32 %v791, %v795
        %v812 = vpack.c.bf16 %v797, %v796
        %v813 = vpack.c.bf16 %v799, %v798
        %v814 = vpack.c.bf16 %v801, %v800
        %v815 = vpack.c.bf16 %v803, %v802
        %v816 = vpack.c.bf16 %v805, %v804
        %v817 = vpack.c.bf16 %v807, %v806
        %v818 = vpack.c.bf16 %v809, %v808
        %v819 = vpack.c.bf16 %v811, %v810
        %s820 = scalar_lea.vmem [#allocation9], 64
        %v821 = vld [vmem:[%s820] sm:$0xf]
        %v822 = vld [vmem:[%s820 + $0x4] sm:$0xf]
        %v823 = vld [vmem:[%s820 + $0x8] sm:$0xf]
        %v824 = vld [vmem:[%s820 + $0xc] sm:$0xf]
        %v825 = vld [vmem:[%s820 + $0x10] sm:$0xf]
        %v826 = vld [vmem:[%s820 + $0x14] sm:$0xf]
        %v827 = vld [vmem:[%s820 + $0x18] sm:$0xf]
        %v828 = vld [vmem:[%s820 + $0x1c] sm:$0xf]
        %v829 = vld [vmem:[%s820 + $0x20] sm:$0xf]
        %v830 = vld [vmem:[%s820 + $0x24] sm:$0xf]
        %v831 = vld [vmem:[%s820 + $0x28] sm:$0xf]
        %v832 = vld [vmem:[%s820 + $0x2c] sm:$0xf]
        %v833 = vld [vmem:[%s820 + $0x30] sm:$0xf]
        %v834 = vld [vmem:[%s820 + $0x34] sm:$0xf]
        %v835 = vld [vmem:[%s820 + $0x38] sm:$0xf]
        %v836 = vld [vmem:[%s820 + $0x3c] sm:$0xf]
        %v837 = vlaneseq
        %v838 = vshrl.u32 %v837, 7
        %v839 = vsub.s32 3, %v838
        %v840 = vrot.slane %v388, %v839
        %v857 = vunpack.c.l.b16 %v821
        %v858 = vunpack.c.l.b16 %v822
        %v859 = vunpack.c.l.b16 %v823
        %v860 = vunpack.c.l.b16 %v824
        %v861 = vunpack.c.l.b16 %v825
        %v862 = vunpack.c.l.b16 %v826
        %v863 = vunpack.c.l.b16 %v827
        %v864 = vunpack.c.l.b16 %v828
        %v865 = vunpack.c.l.b16 %v829
        %v866 = vunpack.c.l.b16 %v830
        %v867 = vunpack.c.l.b16 %v831
        %v868 = vunpack.c.l.b16 %v832
        %v869 = vunpack.c.l.b16 %v833
        %v870 = vunpack.c.l.b16 %v834
        %v871 = vunpack.c.l.b16 %v835
        %v872 = vunpack.c.l.b16 %v836
        %v873 = vpack.c.b16 %v858, %v857
        %v874 = vpack.c.b16 %v860, %v859
        %v875 = vpack.c.b16 %v862, %v861
        %v876 = vpack.c.b16 %v864, %v863
        %v877 = vpack.c.b16 %v866, %v865
        %v878 = vpack.c.b16 %v868, %v867
        %v879 = vpack.c.b16 %v870, %v869
        %v880 = vpack.c.b16 %v872, %v871
        %889 = vmatprep.subr.bf16.mxu0 0
        %890 = vmatpush1.bf16.msra.mxu0 %v873
        %891 = vmatprep.subr.bf16.mxu0 0
        %892 = vmatpush1.bf16.msra.mxu0 %v874
        %893 = vmatprep.subr.bf16.mxu0 0
        %894 = vmatpush1.bf16.msra.mxu0 %v875
        %895 = vmatprep.subr.bf16.mxu0 0
        %896 = vmatpush1.bf16.msra.mxu0 %v876
        %897 = vmatprep.subr.bf16.mxu0 0
        %898 = vmatpush1.bf16.msra.mxu0 %v877
        %899 = vmatprep.subr.bf16.mxu0 0
        %900 = vmatpush1.bf16.msra.mxu0 %v878
        %901 = vmatprep.subr.bf16.mxu0 0
        %902 = vmatpush1.bf16.msra.mxu0 %v879
        %903 = vmatprep.subr.bf16.mxu0 0
        %904 = vmatpush1.bf16.msra.mxu0 %v880
        %905 = vmatprep.subr.bf16.mxu0 0
        %906 = vmatpush1.bf16.msra.mxu0 0
        %907 = vmatprep.subr.bf16.mxu0 0
        %908 = vmatpush1.bf16.msra.mxu0 0
        %909 = vmatprep.subr.bf16.mxu0 0
        %910 = vmatpush1.bf16.msra.mxu0 0
        %911 = vmatprep.subr.bf16.mxu0 0
        %912 = vmatpush1.bf16.msra.mxu0 0
        %913 = vmatprep.subr.bf16.mxu0 0
        %914 = vmatpush1.bf16.msra.mxu0 0
        %915 = vmatprep.subr.bf16.mxu0 0
        %916 = vmatpush1.bf16.msra.mxu0 0
        %917 = vmatprep.subr.bf16.mxu0 0
        %918 = vmatpush1.bf16.msra.mxu0 0
        %919 = vmatprep.subr.bf16.mxu0 0
        %920 = vmatpush1.bf16.msra.mxu0 0
        %921 = vmatprep.mubr.bf16.mxu0 0
        %922 = vmatmul.mubr.bf16.gmra.mrb[0].mxu0 %v812
        %v923 = vpop.f32.mrb[0].mxu0
        %v924 = vadd.f32 %v840, %v923
        %v925 = vpop.f32.mrb[0].mxu0
        %v926 = vpop.f32.mrb[0].mxu0
        %v927 = vadd.f32 %v840, %v926
        %v928 = vpop.f32.mrb[0].mxu0
        %929 = vmatprep.mubr.bf16.mxu0 0
        %930 = vmatmul.mubr.bf16.gmra.mrb[0].mxu0 %v813
        %v931 = vpop.f32.mrb[0].mxu0
        %v932 = vadd.f32 %v840, %v931
        %v933 = vpop.f32.mrb[0].mxu0
        %v934 = vpop.f32.mrb[0].mxu0
        %v935 = vadd.f32 %v840, %v934
        %v936 = vpop.f32.mrb[0].mxu0
        %937 = vmatprep.mubr.bf16.mxu0 0
        %938 = vmatmul.mubr.bf16.gmra.mrb[0].mxu0 %v814
        %v939 = vpop.f32.mrb[0].mxu0
        %v940 = vadd.f32 %v840, %v939
        %v941 = vpop.f32.mrb[0].mxu0
        %v942 = vpop.f32.mrb[0].mxu0
        %v943 = vadd.f32 %v840, %v942
        %v944 = vpop.f32.mrb[0].mxu0
        %945 = vmatprep.mubr.bf16.mxu0 0
        %946 = vmatmul.mubr.bf16.gmra.mrb[0].mxu0 %v815
        %v947 = vpop.f32.mrb[0].mxu0
        %v948 = vadd.f32 %v840, %v947
        %v949 = vpop.f32.mrb[0].mxu0
        %v950 = vpop.f32.mrb[0].mxu0
        %v951 = vadd.f32 %v840, %v950
        %v952 = vpop.f32.mrb[0].mxu0
        %953 = vmatprep.mubr.bf16.mxu0 0
        %954 = vmatmul.mubr.bf16.gmra.mrb[0].mxu0 %v816
        %v955 = vpop.f32.mrb[0].mxu0
        %v956 = vadd.f32 %v840, %v955
        %v957 = vpop.f32.mrb[0].mxu0
        %v958 = vpop.f32.mrb[0].mxu0
        %v959 = vadd.f32 %v840, %v958
        %v960 = vpop.f32.mrb[0].mxu0
        %961 = vmatprep.mubr.bf16.mxu0 0
        %962 = vmatmul.mubr.bf16.gmra.mrb[0].mxu0 %v817
        %v963 = vpop.f32.mrb[0].mxu0
        %v964 = vadd.f32 %v840, %v963
        %v965 = vpop.f32.mrb[0].mxu0
        %v966 = vpop.f32.mrb[0].mxu0
        %v967 = vadd.f32 %v840, %v966
        %v968 = vpop.f32.mrb[0].mxu0
        %969 = vmatprep.mubr.bf16.mxu0 0
        %970 = vmatmul.mubr.bf16.gmra.mrb[0].mxu0 %v818
        %v971 = vpop.f32.mrb[0].mxu0
        %v972 = vadd.f32 %v840, %v971
        %v973 = vpop.f32.mrb[0].mxu0
        %v974 = vpop.f32.mrb[0].mxu0
        %v975 = vadd.f32 %v840, %v974
        %v976 = vpop.f32.mrb[0].mxu0
        %977 = vmatprep.mubr.bf16.mxu0 0
        %978 = vmatmul.mubr.bf16.gmra.mrb[0].mxu0 %v819
        %v979 = vpop.f32.mrb[0].mxu0
        %v980 = vadd.f32 %v840, %v979
        %v981 = vpop.f32.mrb[0].mxu0
        %v982 = vpop.f32.mrb[0].mxu0
        %v983 = vadd.f32 %v840, %v982
        %v984 = vpop.f32.mrb[0].mxu0
        %985 = vdwg.mxu0
        %986 = vadd.xlane.f32.xlu0 %v924
        %v987 = vpop.xlane.xlu0 %986
        %988 = vadd.xlane.f32.xlu0 %v927
        %v989 = vpop.xlane.xlu0 %988
        %990 = vadd.xlane.f32.xlu0 %v932
        %v991 = vpop.xlane.xlu0 %990
        %992 = vadd.xlane.f32.xlu0 %v935
        %v993 = vpop.xlane.xlu0 %992
        %994 = vadd.xlane.f32.xlu0 %v940
        %v995 = vpop.xlane.xlu0 %994
        %996 = vadd.xlane.f32.xlu0 %v943
        %v997 = vpop.xlane.xlu0 %996
        %998 = vadd.xlane.f32.xlu0 %v948
        %v999 = vpop.xlane.xlu0 %998
        %1000 = vadd.xlane.f32.xlu0 %v951
        %v1001 = vpop.xlane.xlu0 %1000
        %1002 = vadd.xlane.f32.xlu0 %v956
        %v1003 = vpop.xlane.xlu0 %1002
        %1004 = vadd.xlane.f32.xlu0 %v959
        %v1005 = vpop.xlane.xlu0 %1004
        %1006 = vadd.xlane.f32.xlu0 %v964
        %v1007 = vpop.xlane.xlu0 %1006
        %1008 = vadd.xlane.f32.xlu0 %v967
        %v1009 = vpop.xlane.xlu0 %1008
        %1010 = vadd.xlane.f32.xlu0 %v972
        %v1011 = vpop.xlane.xlu0 %1010
        %1012 = vadd.xlane.f32.xlu0 %v975
        %v1013 = vpop.xlane.xlu0 %1012
        %1014 = vadd.xlane.f32.xlu0 %v980
        %v1015 = vpop.xlane.xlu0 %1014
        %1016 = vadd.xlane.f32.xlu0 %v983
        %v1017 = vpop.xlane.xlu0 %1016
        %v1018 = vmul.f32 %v987, %v392
        %v1019 = vmul.f32 %v989, %v392
        %v1020 = vmul.f32 %v991, %v392
        %v1021 = vmul.f32 %v993, %v392
        %v1022 = vmul.f32 %v995, %v392
        %v1023 = vmul.f32 %v997, %v392
        %v1024 = vmul.f32 %v999, %v392
        %v1025 = vmul.f32 %v1001, %v392
        %v1026 = vmul.f32 %v1003, %v392
        %v1027 = vmul.f32 %v1005, %v392
        %v1028 = vmul.f32 %v1007, %v392
        %v1029 = vmul.f32 %v1009, %v392
        %v1030 = vmul.f32 %v1011, %v392
        %v1031 = vmul.f32 %v1013, %v392
        %v1032 = vmul.f32 %v1015, %v392
        %v1033 = vmul.f32 %v1017, %v392
        %v1034 = vmul.f32 %v924, %v924
        %v1035 = vmul.f32 %v927, %v927
        %v1036 = vmul.f32 %v932, %v932
        %v1037 = vmul.f32 %v935, %v935
        %v1038 = vmul.f32 %v940, %v940
        %v1039 = vmul.f32 %v943, %v943
        %v1040 = vmul.f32 %v948, %v948
        %v1041 = vmul.f32 %v951, %v951
        %v1042 = vmul.f32 %v956, %v956
        %v1043 = vmul.f32 %v959, %v959
        %v1044 = vmul.f32 %v964, %v964
        %v1045 = vmul.f32 %v967, %v967
        %v1046 = vmul.f32 %v972, %v972
        %v1047 = vmul.f32 %v975, %v975
        %v1048 = vmul.f32 %v980, %v980
        %v1049 = vmul.f32 %v983, %v983
        %1050 = vadd.xlane.f32.xlu0 %v1034
        %v1051 = vpop.xlane.xlu0 %1050
        %1052 = vadd.xlane.f32.xlu0 %v1035
        %v1053 = vpop.xlane.xlu0 %1052
        %1054 = vadd.xlane.f32.xlu0 %v1036
        %v1055 = vpop.xlane.xlu0 %1054
        %1056 = vadd.xlane.f32.xlu0 %v1037
        %v1057 = vpop.xlane.xlu0 %1056
        %1058 = vadd.xlane.f32.xlu0 %v1038
        %v1059 = vpop.xlane.xlu0 %1058
        %1060 = vadd.xlane.f32.xlu0 %v1039
        %v1061 = vpop.xlane.xlu0 %1060
        %1062 = vadd.xlane.f32.xlu0 %v1040
        %v1063 = vpop.xlane.xlu0 %1062
        %1064 = vadd.xlane.f32.xlu0 %v1041
        %v1065 = vpop.xlane.xlu0 %1064
        %1066 = vadd.xlane.f32.xlu0 %v1042
        %v1067 = vpop.xlane.xlu0 %1066
        %1068 = vadd.xlane.f32.xlu0 %v1043
        %v1069 = vpop.xlane.xlu0 %1068
        %1070 = vadd.xlane.f32.xlu0 %v1044
        %v1071 = vpop.xlane.xlu0 %1070
        %1072 = vadd.xlane.f32.xlu0 %v1045
        %v1073 = vpop.xlane.xlu0 %1072
        %1074 = vadd.xlane.f32.xlu0 %v1046
        %v1075 = vpop.xlane.xlu0 %1074
        %1076 = vadd.xlane.f32.xlu0 %v1047
        %v1077 = vpop.xlane.xlu0 %1076
        %1078 = vadd.xlane.f32.xlu0 %v1048
        %v1079 = vpop.xlane.xlu0 %1078
        %1080 = vadd.xlane.f32.xlu0 %v1049
        %v1081 = vpop.xlane.xlu0 %1080
        %v1082 = vmul.f32 %v1051, %v392
        %v1083 = vmul.f32 %v1053, %v392
        %v1084 = vmul.f32 %v1055, %v392
        %v1085 = vmul.f32 %v1057, %v392
        %v1086 = vmul.f32 %v1059, %v392
        %v1087 = vmul.f32 %v1061, %v392
        %v1088 = vmul.f32 %v1063, %v392
        %v1089 = vmul.f32 %v1065, %v392
        %v1090 = vmul.f32 %v1067, %v392
        %v1091 = vmul.f32 %v1069, %v392
        %v1092 = vmul.f32 %v1071, %v392
        %v1093 = vmul.f32 %v1073, %v392
        %v1094 = vmul.f32 %v1075, %v392
        %v1095 = vmul.f32 %v1077, %v392
        %v1096 = vmul.f32 %v1079, %v392
        %v1097 = vmul.f32 %v1081, %v392
        %v1098 = vmul.f32 %v1018, %v1018
        %v1099 = vmul.f32 %v1019, %v1019
        %v1100 = vmul.f32 %v1020, %v1020
        %v1101 = vmul.f32 %v1021, %v1021
        %v1102 = vmul.f32 %v1022, %v1022
        %v1103 = vmul.f32 %v1023, %v1023
        %v1104 = vmul.f32 %v1024, %v1024
        %v1105 = vmul.f32 %v1025, %v1025
        %v1106 = vmul.f32 %v1026, %v1026
        %v1107 = vmul.f32 %v1027, %v1027
        %v1108 = vmul.f32 %v1028, %v1028
        %v1109 = vmul.f32 %v1029, %v1029
        %v1110 = vmul.f32 %v1030, %v1030
        %v1111 = vmul.f32 %v1031, %v1031
        %v1112 = vmul.f32 %v1032, %v1032
        %v1113 = vmul.f32 %v1033, %v1033
        %v1114 = vsub.f32 %v1082, %v1098
        %v1115 = vsub.f32 %v1083, %v1099
        %v1116 = vsub.f32 %v1084, %v1100
        %v1117 = vsub.f32 %v1085, %v1101
        %v1118 = vsub.f32 %v1086, %v1102
        %v1119 = vsub.f32 %v1087, %v1103
        %v1120 = vsub.f32 %v1088, %v1104
        %v1121 = vsub.f32 %v1089, %v1105
        %v1122 = vsub.f32 %v1090, %v1106
        %v1123 = vsub.f32 %v1091, %v1107
        %v1124 = vsub.f32 %v1092, %v1108
        %v1125 = vsub.f32 %v1093, %v1109
        %v1126 = vsub.f32 %v1094, %v1110
        %v1127 = vsub.f32 %v1095, %v1111
        %v1128 = vsub.f32 %v1096, %v1112
        %v1129 = vsub.f32 %v1097, %v1113
        %v1130 = vadd.f32 %v1114, 1e-05
        %v1131 = vadd.f32 %v1115, 1e-05
        %v1132 = vadd.f32 %v1116, 1e-05
        %v1133 = vadd.f32 %v1117, 1e-05
        %v1134 = vadd.f32 %v1118, 1e-05
        %v1135 = vadd.f32 %v1119, 1e-05
        %v1136 = vadd.f32 %v1120, 1e-05
        %v1137 = vadd.f32 %v1121, 1e-05
        %v1138 = vadd.f32 %v1122, 1e-05
        %v1139 = vadd.f32 %v1123, 1e-05
        %v1140 = vadd.f32 %v1124, 1e-05
        %v1141 = vadd.f32 %v1125, 1e-05
        %v1142 = vadd.f32 %v1126, 1e-05
        %v1143 = vadd.f32 %v1127, 1e-05
        %v1144 = vadd.f32 %v1128, 1e-05
        %v1145 = vadd.f32 %v1129, 1e-05
        %v1146 = vrsqrt.pop %v1130
        %v1147 = vrsqrt.pop %v1131
        %v1148 = vrsqrt.pop %v1132
        %v1149 = vrsqrt.pop %v1133
        %v1150 = vrsqrt.pop %v1134
        %v1151 = vrsqrt.pop %v1135
        %v1152 = vrsqrt.pop %v1136
        %v1153 = vrsqrt.pop %v1137
        %v1154 = vrsqrt.pop %v1138
        %v1155 = vrsqrt.pop %v1139
        %v1156 = vrsqrt.pop %v1140
        %v1157 = vrsqrt.pop %v1141
        %v1158 = vrsqrt.pop %v1142
        %v1159 = vrsqrt.pop %v1143
        %v1160 = vrsqrt.pop %v1144
        %v1161 = vrsqrt.pop %v1145
        %v1162 = vsub.f32 %v924, %v1018
        %v1163 = vsub.f32 %v927, %v1019
        %v1164 = vsub.f32 %v932, %v1020
        %v1165 = vsub.f32 %v935, %v1021
        %v1166 = vsub.f32 %v940, %v1022
        %v1167 = vsub.f32 %v943, %v1023
        %v1168 = vsub.f32 %v948, %v1024
        %v1169 = vsub.f32 %v951, %v1025
        %v1170 = vsub.f32 %v956, %v1026
        %v1171 = vsub.f32 %v959, %v1027
        %v1172 = vsub.f32 %v964, %v1028
        %v1173 = vsub.f32 %v967, %v1029
        %v1174 = vsub.f32 %v972, %v1030
        %v1175 = vsub.f32 %v975, %v1031
        %v1176 = vsub.f32 %v980, %v1032
        %v1177 = vsub.f32 %v983, %v1033
        %v1178 = vlaneseq
        %v1179 = vshrl.u32 %v1178, 7
        %v1180 = vsub.s32 4, %v1179
        %v1181 = vrot.slane %v388, %v1180
        %v1182 = vmul.f32 %v1181, %v1146
        %v1183 = vmul.f32 %v1181, %v1147
        %v1184 = vmul.f32 %v1181, %v1148
        %v1185 = vmul.f32 %v1181, %v1149
        %v1186 = vmul.f32 %v1181, %v1150
        %v1187 = vmul.f32 %v1181, %v1151
        %v1188 = vmul.f32 %v1181, %v1152
        %v1189 = vmul.f32 %v1181, %v1153
        %v1190 = vmul.f32 %v1181, %v1154
        %v1191 = vmul.f32 %v1181, %v1155
        %v1192 = vmul.f32 %v1181, %v1156
        %v1193 = vmul.f32 %v1181, %v1157
        %v1194 = vmul.f32 %v1181, %v1158
        %v1195 = vmul.f32 %v1181, %v1159
        %v1196 = vmul.f32 %v1181, %v1160
        %v1197 = vmul.f32 %v1181, %v1161
        %v1198 = vmul.f32 %v1162, %v1182
        %v1199 = vmul.f32 %v1163, %v1183
        %v1200 = vmul.f32 %v1164, %v1184
        %v1201 = vmul.f32 %v1165, %v1185
        %v1202 = vmul.f32 %v1166, %v1186
        %v1203 = vmul.f32 %v1167, %v1187
        %v1204 = vmul.f32 %v1168, %v1188
        %v1205 = vmul.f32 %v1169, %v1189
        %v1206 = vmul.f32 %v1170, %v1190
        %v1207 = vmul.f32 %v1171, %v1191
        %v1208 = vmul.f32 %v1172, %v1192
        %v1209 = vmul.f32 %v1173, %v1193
        %v1210 = vmul.f32 %v1174, %v1194
        %v1211 = vmul.f32 %v1175, %v1195
        %v1212 = vmul.f32 %v1176, %v1196
        %v1213 = vmul.f32 %v1177, %v1197
        %v1214 = vlaneseq
        %v1215 = vshrl.u32 %v1214, 7
        %v1216 = vsub.s32 5, %v1215
        %v1217 = vrot.slane %v388, %v1216
        %v1218 = vadd.f32 %v1198, %v1217
        %v1219 = vadd.f32 %v1199, %v1217
        %v1220 = vadd.f32 %v1200, %v1217
        %v1221 = vadd.f32 %v1201, %v1217
        %v1222 = vadd.f32 %v1202, %v1217
        %v1223 = vadd.f32 %v1203, %v1217
        %v1224 = vadd.f32 %v1204, %v1217
        %v1225 = vadd.f32 %v1205, %v1217
        %v1226 = vadd.f32 %v1206, %v1217
        %v1227 = vadd.f32 %v1207, %v1217
        %v1228 = vadd.f32 %v1208, %v1217
        %v1229 = vadd.f32 %v1209, %v1217
        %v1230 = vadd.f32 %v1210, %v1217
        %v1231 = vadd.f32 %v1211, %v1217
        %v1232 = vadd.f32 %v1212, %v1217
        %v1233 = vadd.f32 %v1213, %v1217
        %v1235 = vcombine.high %v547, %v547
        %v1237 = vunpack.c.l.s4 1966171168
        %v1238 = vunpack.c.0.s8 %v1237
        %v1239 = vlaneseq
        %v1240 = vshrl.u32 %v1239, 7
        %v1241 = vsub.s32 %v1238, %v1240
        %v1242 = vrot.slane %v547, %v1241
        %v1244 = vunpack.c.l.s4 1966171168
        %v1245 = vunpack.c.0.s8 %v1244
        %v1246 = vlaneseq
        %v1247 = vshrl.u32 %v1246, 7
        %v1248 = vsub.s32 %v1245, %v1247
        %v1249 = vrot.slane %v1235, %v1248
        %v1250 = vcombine.high %v1242, %v1242
        %v1251 = vcombine.high %v1249, %v1249
        %v1253 = vunpack.c.l.s4 1966171168
        %v1254 = vunpack.c.0.s8 %v1253
        %v1255 = vlaneseq
        %v1256 = vshrl.u32 %v1255, 7
        %v1257 = vsub.s32 %v1254, %v1256
        %v1258 = vrot.slane %v1242, %v1257
        %v1260 = vunpack.c.l.s4 1966171168
        %v1261 = vunpack.c.0.s8 %v1260
        %v1262 = vlaneseq
        %v1263 = vshrl.u32 %v1262, 7
        %v1264 = vsub.s32 %v1261, %v1263
        %v1265 = vrot.slane %v1249, %v1264
        %v1267 = vunpack.c.l.s4 1966171168
        %v1268 = vunpack.c.0.s8 %v1267
        %v1269 = vlaneseq
        %v1270 = vshrl.u32 %v1269, 7
        %v1271 = vsub.s32 %v1268, %v1270
        %v1272 = vrot.slane %v1250, %v1271
        %v1274 = vunpack.c.l.s4 1966171168
        %v1275 = vunpack.c.0.s8 %v1274
        %v1276 = vlaneseq
        %v1277 = vshrl.u32 %v1276, 7
        %v1278 = vsub.s32 %v1275, %v1277
        %v1279 = vrot.slane %v1251, %v1278
        %v1280 = vcombine.high %v1258, %v1258
        %v1281 = vcombine.high %v1265, %v1265
        %v1282 = vcombine.high %v1272, %v1272
        %v1283 = vcombine.high %v1279, %v1279
        %1292 = vmatprep.subr.mxu0 0.0
        %1293 = vmatpush1.xpose.msra.mxu0 %v1218
        %1294 = vmatprep.subr.mxu0 0.0
        %1295 = vmatpush1.xpose.msra.mxu0 %v1219
        %1296 = vmatprep.subr.mxu0 0.0
        %1297 = vmatpush1.xpose.msra.mxu0 0.0
        %1298 = vmatprep.subr.mxu0 0.0
        %1299 = vmatpush1.xpose.msra.mxu0 0.0
        %1300 = vmatprep.subr.mxu0 0.0
        %1301 = vmatpush1.xpose.msra.mxu0 0.0
        %1302 = vmatprep.subr.mxu0 0.0
        %1303 = vmatpush1.xpose.msra.mxu0 0.0
        %1304 = vmatprep.subr.mxu0 0.0
        %1305 = vmatpush1.xpose.msra.mxu0 0.0
        %1306 = vmatprep.subr.mxu0 0.0
        %1307 = vmatpush1.xpose.msra.mxu0 0.0
        %1308 = vmatprep.subr.mxu0 0.0
        %1309 = vmatpush1.xpose.msra.mxu0 0.0
        %1310 = vmatprep.subr.mxu0 0.0
        %1311 = vmatpush1.xpose.msra.mxu0 0.0
        %1312 = vmatprep.subr.mxu0 0.0
        %1313 = vmatpush1.xpose.msra.mxu0 0.0
        %1314 = vmatprep.subr.mxu0 0.0
        %1315 = vmatpush1.xpose.msra.mxu0 0.0
        %1316 = vmatprep.subr.mxu0 0.0
        %1317 = vmatpush1.xpose.msra.mxu0 0.0
        %1318 = vmatprep.subr.mxu0 0.0
        %1319 = vmatpush1.xpose.msra.mxu0 0.0
        %1320 = vmatprep.subr.mxu0 0.0
        %1321 = vmatpush1.xpose.msra.mxu0 0.0
        %1322 = vmatprep.subr.mxu0 0.0
        %1323 = vmatpush1.xpose.msra.mxu0 0.0
        %1324 = vmatprep.subr.mxu0 0.0
        %1325 = vmatpush1.xpose.msra.mxu0 0.0
        %1326 = vmatprep.subr.mxu0 0.0
        %1327 = vmatpush1.xpose.msra.mxu0 0.0
        %1328 = vmatprep.subr.mxu0 0.0
        %1329 = vmatpush1.xpose.msra.mxu0 0.0
        %1330 = vmatprep.subr.mxu0 0.0
        %1331 = vmatpush1.xpose.msra.mxu0 0.0
        %1332 = vmatprep.subr.mxu0 0.0
        %1333 = vmatpush1.xpose.msra.mxu0 0.0
        %1334 = vmatprep.subr.mxu0 0.0
        %1335 = vmatpush1.xpose.msra.mxu0 0.0
        %1336 = vmatprep.subr.mxu0 0.0
        %1337 = vmatpush1.xpose.msra.mxu0 0.0
        %1338 = vmatprep.subr.mxu0 0.0
        %1339 = vmatpush1.xpose.msra.mxu0 0.0
        %1340 = vmatprep.subr.mxu0 0.0
        %1341 = vmatpush1.xpose.msra.mxu0 0.0
        %1342 = vmatprep.subr.mxu0 0.0
        %1343 = vmatpush1.xpose.msra.mxu0 0.0
        %1344 = vmatprep.subr.mxu0 0.0
        %1345 = vmatpush1.xpose.msra.mxu0 0.0
        %1346 = vmatprep.subr.mxu0 0.0
        %1347 = vmatpush1.xpose.msra.mxu0 0.0
        %1348 = vmatprep.subr.mxu0 0.0
        %1349 = vmatpush1.xpose.msra.mxu0 0.0
        %1350 = vmatprep.subr.mxu0 0.0
        %1351 = vmatpush1.xpose.msra.mxu0 0.0
        %1352 = vmatprep.subr.mxu0 0.0
        %1353 = vmatpush1.xpose.msra.mxu0 0.0
        %1354 = vmatprep.subr.mxu0 0.0
        %1355 = vmatpush1.xpose.msra.mxu0 0.0
        %1356 = vmatprep.mubr.f32.mxu0 0.0
        %1357 = vmatmul.mubr.f32.gmra.mrb[0].mxu0 %v1258
        %v1358 = vpop.f32.mrb[0].mxu0
        %v1359 = vadd.f32 0.0, %v1358
        %v1360 = vpop.f32.mrb[0].mxu0
        %1361 = vdwg.mxu0
        %1362 = vmatprep.subr.mxu0 0.0
        %1363 = vmatpush1.xpose.msra.mxu0 %v1220
        %1364 = vmatprep.subr.mxu0 0.0
        %1365 = vmatpush1.xpose.msra.mxu0 %v1221
        %1366 = vmatprep.subr.mxu0 0.0
        %1367 = vmatpush1.xpose.msra.mxu0 0.0
        %1368 = vmatprep.subr.mxu0 0.0
        %1369 = vmatpush1.xpose.msra.mxu0 0.0
        %1370 = vmatprep.subr.mxu0 0.0
        %1371 = vmatpush1.xpose.msra.mxu0 0.0
        %1372 = vmatprep.subr.mxu0 0.0
        %1373 = vmatpush1.xpose.msra.mxu0 0.0
        %1374 = vmatprep.subr.mxu0 0.0
        %1375 = vmatpush1.xpose.msra.mxu0 0.0
        %1376 = vmatprep.subr.mxu0 0.0
        %1377 = vmatpush1.xpose.msra.mxu0 0.0
        %1378 = vmatprep.subr.mxu0 0.0
        %1379 = vmatpush1.xpose.msra.mxu0 0.0
        %1380 = vmatprep.subr.mxu0 0.0
        %1381 = vmatpush1.xpose.msra.mxu0 0.0
        %1382 = vmatprep.subr.mxu0 0.0
        %1383 = vmatpush1.xpose.msra.mxu0 0.0
        %1384 = vmatprep.subr.mxu0 0.0
        %1385 = vmatpush1.xpose.msra.mxu0 0.0
        %1386 = vmatprep.subr.mxu0 0.0
        %1387 = vmatpush1.xpose.msra.mxu0 0.0
        %1388 = vmatprep.subr.mxu0 0.0
        %1389 = vmatpush1.xpose.msra.mxu0 0.0
        %1390 = vmatprep.subr.mxu0 0.0
        %1391 = vmatpush1.xpose.msra.mxu0 0.0
        %1392 = vmatprep.subr.mxu0 0.0
        %1393 = vmatpush1.xpose.msra.mxu0 0.0
        %1394 = vmatprep.subr.mxu0 0.0
        %1395 = vmatpush1.xpose.msra.mxu0 0.0
        %1396 = vmatprep.subr.mxu0 0.0
        %1397 = vmatpush1.xpose.msra.mxu0 0.0
        %1398 = vmatprep.subr.mxu0 0.0
        %1399 = vmatpush1.xpose.msra.mxu0 0.0
        %1400 = vmatprep.subr.mxu0 0.0
        %1401 = vmatpush1.xpose.msra.mxu0 0.0
        %1402 = vmatprep.subr.mxu0 0.0
        %1403 = vmatpush1.xpose.msra.mxu0 0.0
        %1404 = vmatprep.subr.mxu0 0.0
        %1405 = vmatpush1.xpose.msra.mxu0 0.0
        %1406 = vmatprep.subr.mxu0 0.0
        %1407 = vmatpush1.xpose.msra.mxu0 0.0
        %1408 = vmatprep.subr.mxu0 0.0
        %1409 = vmatpush1.xpose.msra.mxu0 0.0
        %1410 = vmatprep.subr.mxu0 0.0
        %1411 = vmatpush1.xpose.msra.mxu0 0.0
        %1412 = vmatprep.subr.mxu0 0.0
        %1413 = vmatpush1.xpose.msra.mxu0 0.0
        %1414 = vmatprep.subr.mxu0 0.0
        %1415 = vmatpush1.xpose.msra.mxu0 0.0
        %1416 = vmatprep.subr.mxu0 0.0
        %1417 = vmatpush1.xpose.msra.mxu0 0.0
        %1418 = vmatprep.subr.mxu0 0.0
        %1419 = vmatpush1.xpose.msra.mxu0 0.0
        %1420 = vmatprep.subr.mxu0 0.0
        %1421 = vmatpush1.xpose.msra.mxu0 0.0
        %1422 = vmatprep.subr.mxu0 0.0
        %1423 = vmatpush1.xpose.msra.mxu0 0.0
        %1424 = vmatprep.subr.mxu0 0.0
        %1425 = vmatpush1.xpose.msra.mxu0 0.0
        %1426 = vmatprep.mubr.f32.mxu0 0.0
        %1427 = vmatmul.mubr.f32.gmra.mrb[0].mxu0 %v1272
        %v1428 = vpop.f32.mrb[0].mxu0
        %v1429 = vadd.f32 0.0, %v1428
        %v1430 = vpop.f32.mrb[0].mxu0
        %1431 = vdwg.mxu0
        %1432 = vmatprep.subr.mxu0 0.0
        %1433 = vmatpush1.xpose.msra.mxu0 %v1222
        %1434 = vmatprep.subr.mxu0 0.0
        %1435 = vmatpush1.xpose.msra.mxu0 %v1223
        %1436 = vmatprep.subr.mxu0 0.0
        %1437 = vmatpush1.xpose.msra.mxu0 0.0
        %1438 = vmatprep.subr.mxu0 0.0
        %1439 = vmatpush1.xpose.msra.mxu0 0.0
        %1440 = vmatprep.subr.mxu0 0.0
        %1441 = vmatpush1.xpose.msra.mxu0 0.0
        %1442 = vmatprep.subr.mxu0 0.0
        %1443 = vmatpush1.xpose.msra.mxu0 0.0
        %1444 = vmatprep.subr.mxu0 0.0
        %1445 = vmatpush1.xpose.msra.mxu0 0.0
        %1446 = vmatprep.subr.mxu0 0.0
        %1447 = vmatpush1.xpose.msra.mxu0 0.0
        %1448 = vmatprep.subr.mxu0 0.0
        %1449 = vmatpush1.xpose.msra.mxu0 0.0
        %1450 = vmatprep.subr.mxu0 0.0
        %1451 = vmatpush1.xpose.msra.mxu0 0.0
        %1452 = vmatprep.subr.mxu0 0.0
        %1453 = vmatpush1.xpose.msra.mxu0 0.0
        %1454 = vmatprep.subr.mxu0 0.0
        %1455 = vmatpush1.xpose.msra.mxu0 0.0
        %1456 = vmatprep.subr.mxu0 0.0
        %1457 = vmatpush1.xpose.msra.mxu0 0.0
        %1458 = vmatprep.subr.mxu0 0.0
        %1459 = vmatpush1.xpose.msra.mxu0 0.0
        %1460 = vmatprep.subr.mxu0 0.0
        %1461 = vmatpush1.xpose.msra.mxu0 0.0
        %1462 = vmatprep.subr.mxu0 0.0
        %1463 = vmatpush1.xpose.msra.mxu0 0.0
        %1464 = vmatprep.subr.mxu0 0.0
        %1465 = vmatpush1.xpose.msra.mxu0 0.0
        %1466 = vmatprep.subr.mxu0 0.0
        %1467 = vmatpush1.xpose.msra.mxu0 0.0
        %1468 = vmatprep.subr.mxu0 0.0
        %1469 = vmatpush1.xpose.msra.mxu0 0.0
        %1470 = vmatprep.subr.mxu0 0.0
        %1471 = vmatpush1.xpose.msra.mxu0 0.0
        %1472 = vmatprep.subr.mxu0 0.0
        %1473 = vmatpush1.xpose.msra.mxu0 0.0
        %1474 = vmatprep.subr.mxu0 0.0
        %1475 = vmatpush1.xpose.msra.mxu0 0.0
        %1476 = vmatprep.subr.mxu0 0.0
        %1477 = vmatpush1.xpose.msra.mxu0 0.0
        %1478 = vmatprep.subr.mxu0 0.0
        %1479 = vmatpush1.xpose.msra.mxu0 0.0
        %1480 = vmatprep.subr.mxu0 0.0
        %1481 = vmatpush1.xpose.msra.mxu0 0.0
        %1482 = vmatprep.subr.mxu0 0.0
        %1483 = vmatpush1.xpose.msra.mxu0 0.0
        %1484 = vmatprep.subr.mxu0 0.0
        %1485 = vmatpush1.xpose.msra.mxu0 0.0
        %1486 = vmatprep.subr.mxu0 0.0
        %1487 = vmatpush1.xpose.msra.mxu0 0.0
        %1488 = vmatprep.subr.mxu0 0.0
        %1489 = vmatpush1.xpose.msra.mxu0 0.0
        %1490 = vmatprep.subr.mxu0 0.0
        %1491 = vmatpush1.xpose.msra.mxu0 0.0
        %1492 = vmatprep.subr.mxu0 0.0
        %1493 = vmatpush1.xpose.msra.mxu0 0.0
        %1494 = vmatprep.subr.mxu0 0.0
        %1495 = vmatpush1.xpose.msra.mxu0 0.0
        %1496 = vmatprep.mubr.f32.mxu0 0.0
        %1497 = vmatmul.mubr.f32.gmra.mrb[0].mxu0 %v1280
        %v1498 = vpop.f32.mrb[0].mxu0
        %v1499 = vadd.f32 0.0, %v1498
        %v1500 = vpop.f32.mrb[0].mxu0
        %1501 = vdwg.mxu0
        %1502 = vmatprep.subr.mxu0 0.0
        %1503 = vmatpush1.xpose.msra.mxu0 %v1224
        %1504 = vmatprep.subr.mxu0 0.0
        %1505 = vmatpush1.xpose.msra.mxu0 %v1225
        %1506 = vmatprep.subr.mxu0 0.0
        %1507 = vmatpush1.xpose.msra.mxu0 0.0
        %1508 = vmatprep.subr.mxu0 0.0
        %1509 = vmatpush1.xpose.msra.mxu0 0.0
        %1510 = vmatprep.subr.mxu0 0.0
        %1511 = vmatpush1.xpose.msra.mxu0 0.0
        %1512 = vmatprep.subr.mxu0 0.0
        %1513 = vmatpush1.xpose.msra.mxu0 0.0
        %1514 = vmatprep.subr.mxu0 0.0
        %1515 = vmatpush1.xpose.msra.mxu0 0.0
        %1516 = vmatprep.subr.mxu0 0.0
        %1517 = vmatpush1.xpose.msra.mxu0 0.0
        %1518 = vmatprep.subr.mxu0 0.0
        %1519 = vmatpush1.xpose.msra.mxu0 0.0
        %1520 = vmatprep.subr.mxu0 0.0
        %1521 = vmatpush1.xpose.msra.mxu0 0.0
        %1522 = vmatprep.subr.mxu0 0.0
        %1523 = vmatpush1.xpose.msra.mxu0 0.0
        %1524 = vmatprep.subr.mxu0 0.0
        %1525 = vmatpush1.xpose.msra.mxu0 0.0
        %1526 = vmatprep.subr.mxu0 0.0
        %1527 = vmatpush1.xpose.msra.mxu0 0.0
        %1528 = vmatprep.subr.mxu0 0.0
        %1529 = vmatpush1.xpose.msra.mxu0 0.0
        %1530 = vmatprep.subr.mxu0 0.0
        %1531 = vmatpush1.xpose.msra.mxu0 0.0
        %1532 = vmatprep.subr.mxu0 0.0
        %1533 = vmatpush1.xpose.msra.mxu0 0.0
        %1534 = vmatprep.subr.mxu0 0.0
        %1535 = vmatpush1.xpose.msra.mxu0 0.0
        %1536 = vmatprep.subr.mxu0 0.0
        %1537 = vmatpush1.xpose.msra.mxu0 0.0
        %1538 = vmatprep.subr.mxu0 0.0
        %1539 = vmatpush1.xpose.msra.mxu0 0.0
        %1540 = vmatprep.subr.mxu0 0.0
        %1541 = vmatpush1.xpose.msra.mxu0 0.0
        %1542 = vmatprep.subr.mxu0 0.0
        %1543 = vmatpush1.xpose.msra.mxu0 0.0
        %1544 = vmatprep.subr.mxu0 0.0
        %1545 = vmatpush1.xpose.msra.mxu0 0.0
        %1546 = vmatprep.subr.mxu0 0.0
        %1547 = vmatpush1.xpose.msra.mxu0 0.0
        %1548 = vmatprep.subr.mxu0 0.0
        %1549 = vmatpush1.xpose.msra.mxu0 0.0
        %1550 = vmatprep.subr.mxu0 0.0
        %1551 = vmatpush1.xpose.msra.mxu0 0.0
        %1552 = vmatprep.subr.mxu0 0.0
        %1553 = vmatpush1.xpose.msra.mxu0 0.0
        %1554 = vmatprep.subr.mxu0 0.0
        %1555 = vmatpush1.xpose.msra.mxu0 0.0
        %1556 = vmatprep.subr.mxu0 0.0
        %1557 = vmatpush1.xpose.msra.mxu0 0.0
        %1558 = vmatprep.subr.mxu0 0.0
        %1559 = vmatpush1.xpose.msra.mxu0 0.0
        %1560 = vmatprep.subr.mxu0 0.0
        %1561 = vmatpush1.xpose.msra.mxu0 0.0
        %1562 = vmatprep.subr.mxu0 0.0
        %1563 = vmatpush1.xpose.msra.mxu0 0.0
        %1564 = vmatprep.subr.mxu0 0.0
        %1565 = vmatpush1.xpose.msra.mxu0 0.0
        %1566 = vmatprep.mubr.f32.mxu0 0.0
        %1567 = vmatmul.mubr.f32.gmra.mrb[0].mxu0 %v1282
        %v1568 = vpop.f32.mrb[0].mxu0
        %v1569 = vadd.f32 0.0, %v1568
        %v1570 = vpop.f32.mrb[0].mxu0
        %1571 = vdwg.mxu0
        %1572 = vmatprep.subr.mxu0 0.0
        %1573 = vmatpush1.xpose.msra.mxu0 %v1226
        %1574 = vmatprep.subr.mxu0 0.0
        %1575 = vmatpush1.xpose.msra.mxu0 %v1227
        %1576 = vmatprep.subr.mxu0 0.0
        %1577 = vmatpush1.xpose.msra.mxu0 0.0
        %1578 = vmatprep.subr.mxu0 0.0
        %1579 = vmatpush1.xpose.msra.mxu0 0.0
        %1580 = vmatprep.subr.mxu0 0.0
        %1581 = vmatpush1.xpose.msra.mxu0 0.0
        %1582 = vmatprep.subr.mxu0 0.0
        %1583 = vmatpush1.xpose.msra.mxu0 0.0
        %1584 = vmatprep.subr.mxu0 0.0
        %1585 = vmatpush1.xpose.msra.mxu0 0.0
        %1586 = vmatprep.subr.mxu0 0.0
        %1587 = vmatpush1.xpose.msra.mxu0 0.0
        %1588 = vmatprep.subr.mxu0 0.0
        %1589 = vmatpush1.xpose.msra.mxu0 0.0
        %1590 = vmatprep.subr.mxu0 0.0
        %1591 = vmatpush1.xpose.msra.mxu0 0.0
        %1592 = vmatprep.subr.mxu0 0.0
        %1593 = vmatpush1.xpose.msra.mxu0 0.0
        %1594 = vmatprep.subr.mxu0 0.0
        %1595 = vmatpush1.xpose.msra.mxu0 0.0
        %1596 = vmatprep.subr.mxu0 0.0
        %1597 = vmatpush1.xpose.msra.mxu0 0.0
        %1598 = vmatprep.subr.mxu0 0.0
        %1599 = vmatpush1.xpose.msra.mxu0 0.0
        %1600 = vmatprep.subr.mxu0 0.0
        %1601 = vmatpush1.xpose.msra.mxu0 0.0
        %1602 = vmatprep.subr.mxu0 0.0
        %1603 = vmatpush1.xpose.msra.mxu0 0.0
        %1604 = vmatprep.subr.mxu0 0.0
        %1605 = vmatpush1.xpose.msra.mxu0 0.0
        %1606 = vmatprep.subr.mxu0 0.0
        %1607 = vmatpush1.xpose.msra.mxu0 0.0
        %1608 = vmatprep.subr.mxu0 0.0
        %1609 = vmatpush1.xpose.msra.mxu0 0.0
        %1610 = vmatprep.subr.mxu0 0.0
        %1611 = vmatpush1.xpose.msra.mxu0 0.0
        %1612 = vmatprep.subr.mxu0 0.0
        %1613 = vmatpush1.xpose.msra.mxu0 0.0
        %1614 = vmatprep.subr.mxu0 0.0
        %1615 = vmatpush1.xpose.msra.mxu0 0.0
        %1616 = vmatprep.subr.mxu0 0.0
        %1617 = vmatpush1.xpose.msra.mxu0 0.0
        %1618 = vmatprep.subr.mxu0 0.0
        %1619 = vmatpush1.xpose.msra.mxu0 0.0
        %1620 = vmatprep.subr.mxu0 0.0
        %1621 = vmatpush1.xpose.msra.mxu0 0.0
        %1622 = vmatprep.subr.mxu0 0.0
        %1623 = vmatpush1.xpose.msra.mxu0 0.0
        %1624 = vmatprep.subr.mxu0 0.0
        %1625 = vmatpush1.xpose.msra.mxu0 0.0
        %1626 = vmatprep.subr.mxu0 0.0
        %1627 = vmatpush1.xpose.msra.mxu0 0.0
        %1628 = vmatprep.subr.mxu0 0.0
        %1629 = vmatpush1.xpose.msra.mxu0 0.0
        %1630 = vmatprep.subr.mxu0 0.0
        %1631 = vmatpush1.xpose.msra.mxu0 0.0
        %1632 = vmatprep.subr.mxu0 0.0
        %1633 = vmatpush1.xpose.msra.mxu0 0.0
        %1634 = vmatprep.subr.mxu0 0.0
        %1635 = vmatpush1.xpose.msra.mxu0 0.0
        %1636 = vmatprep.mubr.f32.mxu0 0.0
        %1637 = vmatmul.mubr.f32.gmra.mrb[0].mxu0 %v1265
        %v1638 = vpop.f32.mrb[0].mxu0
        %v1639 = vadd.f32 0.0, %v1638
        %v1640 = vpop.f32.mrb[0].mxu0
        %1641 = vdwg.mxu0
        %1642 = vmatprep.subr.mxu0 0.0
        %1643 = vmatpush1.xpose.msra.mxu0 %v1228
        %1644 = vmatprep.subr.mxu0 0.0
        %1645 = vmatpush1.xpose.msra.mxu0 %v1229
        %1646 = vmatprep.subr.mxu0 0.0
        %1647 = vmatpush1.xpose.msra.mxu0 0.0
        %1648 = vmatprep.subr.mxu0 0.0
        %1649 = vmatpush1.xpose.msra.mxu0 0.0
        %1650 = vmatprep.subr.mxu0 0.0
        %1651 = vmatpush1.xpose.msra.mxu0 0.0
        %1652 = vmatprep.subr.mxu0 0.0
        %1653 = vmatpush1.xpose.msra.mxu0 0.0
        %1654 = vmatprep.subr.mxu0 0.0
        %1655 = vmatpush1.xpose.msra.mxu0 0.0
        %1656 = vmatprep.subr.mxu0 0.0
        %1657 = vmatpush1.xpose.msra.mxu0 0.0
        %1658 = vmatprep.subr.mxu0 0.0
        %1659 = vmatpush1.xpose.msra.mxu0 0.0
        %1660 = vmatprep.subr.mxu0 0.0
        %1661 = vmatpush1.xpose.msra.mxu0 0.0
        %1662 = vmatprep.subr.mxu0 0.0
        %1663 = vmatpush1.xpose.msra.mxu0 0.0
        %1664 = vmatprep.subr.mxu0 0.0
        %1665 = vmatpush1.xpose.msra.mxu0 0.0
        %1666 = vmatprep.subr.mxu0 0.0
        %1667 = vmatpush1.xpose.msra.mxu0 0.0
        %1668 = vmatprep.subr.mxu0 0.0
        %1669 = vmatpush1.xpose.msra.mxu0 0.0
        %1670 = vmatprep.subr.mxu0 0.0
        %1671 = vmatpush1.xpose.msra.mxu0 0.0
        %1672 = vmatprep.subr.mxu0 0.0
        %1673 = vmatpush1.xpose.msra.mxu0 0.0
        %1674 = vmatprep.subr.mxu0 0.0
        %1675 = vmatpush1.xpose.msra.mxu0 0.0
        %1676 = vmatprep.subr.mxu0 0.0
        %1677 = vmatpush1.xpose.msra.mxu0 0.0
        %1678 = vmatprep.subr.mxu0 0.0
        %1679 = vmatpush1.xpose.msra.mxu0 0.0
        %1680 = vmatprep.subr.mxu0 0.0
        %1681 = vmatpush1.xpose.msra.mxu0 0.0
        %1682 = vmatprep.subr.mxu0 0.0
        %1683 = vmatpush1.xpose.msra.mxu0 0.0
        %1684 = vmatprep.subr.mxu0 0.0
        %1685 = vmatpush1.xpose.msra.mxu0 0.0
        %1686 = vmatprep.subr.mxu0 0.0
        %1687 = vmatpush1.xpose.msra.mxu0 0.0
        %1688 = vmatprep.subr.mxu0 0.0
        %1689 = vmatpush1.xpose.msra.mxu0 0.0
        %1690 = vmatprep.subr.mxu0 0.0
        %1691 = vmatpush1.xpose.msra.mxu0 0.0
        %1692 = vmatprep.subr.mxu0 0.0
        %1693 = vmatpush1.xpose.msra.mxu0 0.0
        %1694 = vmatprep.subr.mxu0 0.0
        %1695 = vmatpush1.xpose.msra.mxu0 0.0
        %1696 = vmatprep.subr.mxu0 0.0
        %1697 = vmatpush1.xpose.msra.mxu0 0.0
        %1698 = vmatprep.subr.mxu0 0.0
        %1699 = vmatpush1.xpose.msra.mxu0 0.0
        %1700 = vmatprep.subr.mxu0 0.0
        %1701 = vmatpush1.xpose.msra.mxu0 0.0
        %1702 = vmatprep.subr.mxu0 0.0
        %1703 = vmatpush1.xpose.msra.mxu0 0.0
        %1704 = vmatprep.subr.mxu0 0.0
        %1705 = vmatpush1.xpose.msra.mxu0 0.0
        %1706 = vmatprep.mubr.f32.mxu0 0.0
        %1707 = vmatmul.mubr.f32.gmra.mrb[0].mxu0 %v1279
        %v1708 = vpop.f32.mrb[0].mxu0
        %v1709 = vadd.f32 0.0, %v1708
        %v1710 = vpop.f32.mrb[0].mxu0
        %1711 = vdwg.mxu0
        %1712 = vmatprep.subr.mxu0 0.0
        %1713 = vmatpush1.xpose.msra.mxu0 %v1230
        %1714 = vmatprep.subr.mxu0 0.0
        %1715 = vmatpush1.xpose.msra.mxu0 %v1231
        %1716 = vmatprep.subr.mxu0 0.0
        %1717 = vmatpush1.xpose.msra.mxu0 0.0
        %1718 = vmatprep.subr.mxu0 0.0
        %1719 = vmatpush1.xpose.msra.mxu0 0.0
        %1720 = vmatprep.subr.mxu0 0.0
        %1721 = vmatpush1.xpose.msra.mxu0 0.0
        %1722 = vmatprep.subr.mxu0 0.0
        %1723 = vmatpush1.xpose.msra.mxu0 0.0
        %1724 = vmatprep.subr.mxu0 0.0
        %1725 = vmatpush1.xpose.msra.mxu0 0.0
        %1726 = vmatprep.subr.mxu0 0.0
        %1727 = vmatpush1.xpose.msra.mxu0 0.0
        %1728 = vmatprep.subr.mxu0 0.0
        %1729 = vmatpush1.xpose.msra.mxu0 0.0
        %1730 = vmatprep.subr.mxu0 0.0
        %1731 = vmatpush1.xpose.msra.mxu0 0.0
        %1732 = vmatprep.subr.mxu0 0.0
        %1733 = vmatpush1.xpose.msra.mxu0 0.0
        %1734 = vmatprep.subr.mxu0 0.0
        %1735 = vmatpush1.xpose.msra.mxu0 0.0
        %1736 = vmatprep.subr.mxu0 0.0
        %1737 = vmatpush1.xpose.msra.mxu0 0.0
        %1738 = vmatprep.subr.mxu0 0.0
        %1739 = vmatpush1.xpose.msra.mxu0 0.0
        %1740 = vmatprep.subr.mxu0 0.0
        %1741 = vmatpush1.xpose.msra.mxu0 0.0
        %1742 = vmatprep.subr.mxu0 0.0
        %1743 = vmatpush1.xpose.msra.mxu0 0.0
        %1744 = vmatprep.subr.mxu0 0.0
        %1745 = vmatpush1.xpose.msra.mxu0 0.0
        %1746 = vmatprep.subr.mxu0 0.0
        %1747 = vmatpush1.xpose.msra.mxu0 0.0
        %1748 = vmatprep.subr.mxu0 0.0
        %1749 = vmatpush1.xpose.msra.mxu0 0.0
        %1750 = vmatprep.subr.mxu0 0.0
        %1751 = vmatpush1.xpose.msra.mxu0 0.0
        %1752 = vmatprep.subr.mxu0 0.0
        %1753 = vmatpush1.xpose.msra.mxu0 0.0
        %1754 = vmatprep.subr.mxu0 0.0
        %1755 = vmatpush1.xpose.msra.mxu0 0.0
        %1756 = vmatprep.subr.mxu0 0.0
        %1757 = vmatpush1.xpose.msra.mxu0 0.0
        %1758 = vmatprep.subr.mxu0 0.0
        %1759 = vmatpush1.xpose.msra.mxu0 0.0
        %1760 = vmatprep.subr.mxu0 0.0
        %1761 = vmatpush1.xpose.msra.mxu0 0.0
        %1762 = vmatprep.subr.mxu0 0.0
        %1763 = vmatpush1.xpose.msra.mxu0 0.0
        %1764 = vmatprep.subr.mxu0 0.0
        %1765 = vmatpush1.xpose.msra.mxu0 0.0
        %1766 = vmatprep.subr.mxu0 0.0
        %1767 = vmatpush1.xpose.msra.mxu0 0.0
        %1768 = vmatprep.subr.mxu0 0.0
        %1769 = vmatpush1.xpose.msra.mxu0 0.0
        %1770 = vmatprep.subr.mxu0 0.0
        %1771 = vmatpush1.xpose.msra.mxu0 0.0
        %1772 = vmatprep.subr.mxu0 0.0
        %1773 = vmatpush1.xpose.msra.mxu0 0.0
        %1774 = vmatprep.subr.mxu0 0.0
        %1775 = vmatpush1.xpose.msra.mxu0 0.0
        %1776 = vmatprep.mubr.f32.mxu0 0.0
        %1777 = vmatmul.mubr.f32.gmra.mrb[0].mxu0 %v1281
        %v1778 = vpop.f32.mrb[0].mxu0
        %v1779 = vadd.f32 0.0, %v1778
        %v1780 = vpop.f32.mrb[0].mxu0
        %1781 = vdwg.mxu0
        %1782 = vmatprep.subr.mxu0 0.0
        %1783 = vmatpush1.xpose.msra.mxu0 %v1232
        %1784 = vmatprep.subr.mxu0 0.0
        %1785 = vmatpush1.xpose.msra.mxu0 %v1233
        %1786 = vmatprep.subr.mxu0 0.0
        %1787 = vmatpush1.xpose.msra.mxu0 0.0
        %1788 = vmatprep.subr.mxu0 0.0
        %1789 = vmatpush1.xpose.msra.mxu0 0.0
        %1790 = vmatprep.subr.mxu0 0.0
        %1791 = vmatpush1.xpose.msra.mxu0 0.0
        %1792 = vmatprep.subr.mxu0 0.0
        %1793 = vmatpush1.xpose.msra.mxu0 0.0
        %1794 = vmatprep.subr.mxu0 0.0
        %1795 = vmatpush1.xpose.msra.mxu0 0.0
        %1796 = vmatprep.subr.mxu0 0.0
        %1797 = vmatpush1.xpose.msra.mxu0 0.0
        %1798 = vmatprep.subr.mxu0 0.0
        %1799 = vmatpush1.xpose.msra.mxu0 0.0
        %1800 = vmatprep.subr.mxu0 0.0
        %1801 = vmatpush1.xpose.msra.mxu0 0.0
        %1802 = vmatprep.subr.mxu0 0.0
        %1803 = vmatpush1.xpose.msra.mxu0 0.0
        %1804 = vmatprep.subr.mxu0 0.0
        %1805 = vmatpush1.xpose.msra.mxu0 0.0
        %1806 = vmatprep.subr.mxu0 0.0
        %1807 = vmatpush1.xpose.msra.mxu0 0.0
        %1808 = vmatprep.subr.mxu0 0.0
        %1809 = vmatpush1.xpose.msra.mxu0 0.0
        %1810 = vmatprep.subr.mxu0 0.0
        %1811 = vmatpush1.xpose.msra.mxu0 0.0
        %1812 = vmatprep.subr.mxu0 0.0
        %1813 = vmatpush1.xpose.msra.mxu0 0.0
        %1814 = vmatprep.subr.mxu0 0.0
        %1815 = vmatpush1.xpose.msra.mxu0 0.0
        %1816 = vmatprep.subr.mxu0 0.0
        %1817 = vmatpush1.xpose.msra.mxu0 0.0
        %1818 = vmatprep.subr.mxu0 0.0
        %1819 = vmatpush1.xpose.msra.mxu0 0.0
        %1820 = vmatprep.subr.mxu0 0.0
        %1821 = vmatpush1.xpose.msra.mxu0 0.0
        %1822 = vmatprep.subr.mxu0 0.0
        %1823 = vmatpush1.xpose.msra.mxu0 0.0
        %1824 = vmatprep.subr.mxu0 0.0
        %1825 = vmatpush1.xpose.msra.mxu0 0.0
        %1826 = vmatprep.subr.mxu0 0.0
        %1827 = vmatpush1.xpose.msra.mxu0 0.0
        %1828 = vmatprep.subr.mxu0 0.0
        %1829 = vmatpush1.xpose.msra.mxu0 0.0
        %1830 = vmatprep.subr.mxu0 0.0
        %1831 = vmatpush1.xpose.msra.mxu0 0.0
        %1832 = vmatprep.subr.mxu0 0.0
        %1833 = vmatpush1.xpose.msra.mxu0 0.0
        %1834 = vmatprep.subr.mxu0 0.0
        %1835 = vmatpush1.xpose.msra.mxu0 0.0
        %1836 = vmatprep.subr.mxu0 0.0
        %1837 = vmatpush1.xpose.msra.mxu0 0.0
        %1838 = vmatprep.subr.mxu0 0.0
        %1839 = vmatpush1.xpose.msra.mxu0 0.0
        %1840 = vmatprep.subr.mxu0 0.0
        %1841 = vmatpush1.xpose.msra.mxu0 0.0
        %1842 = vmatprep.subr.mxu0 0.0
        %1843 = vmatpush1.xpose.msra.mxu0 0.0
        %1844 = vmatprep.subr.mxu0 0.0
        %1845 = vmatpush1.xpose.msra.mxu0 0.0
        %1846 = vmatprep.mubr.f32.mxu0 0.0
        %1847 = vmatmul.mubr.f32.gmra.mrb[0].mxu0 %v1283
        %v1848 = vpop.f32.mrb[0].mxu0
        %v1849 = vadd.f32 0.0, %v1848
        %v1850 = vpop.f32.mrb[0].mxu0
        %1851 = vdwg.mxu0
        %v1860 = vrot.slane %v1429, 7
        %vm1861 = vcmask 1041409
        %v1862 = vsel %vm1861, %v1860, %v1359
        %v1863 = vrot.slane %v1499, 6
        %vm1864 = vcmask 1042434
        %v1865 = vsel %vm1864, %v1863, %v1862
        %v1866 = vrot.slane %v1569, 5
        %vm1867 = vcmask 1043459
        %v1868 = vsel %vm1867, %v1866, %v1865
        %v1869 = vrot.slane %v1639, 4
        %vm1870 = vcmask 1044484
        %v1871 = vsel %vm1870, %v1869, %v1868
        %v1872 = vrot.slane %v1709, 3
        %vm1873 = vcmask 1045509
        %v1874 = vsel %vm1873, %v1872, %v1871
        %v1875 = vrot.slane %v1779, 2
        %vm1876 = vcmask 1046534
        %v1877 = vsel %vm1876, %v1875, %v1874
        %v1878 = vrot.slane %v1849, 1
        %vm1879 = vcmask 1047559
        %v1880 = vsel %vm1879, %v1878, %v1877
        %vm1882 = vcmask 130048
        %v1883 = vsel %vm1882, %v1880, -inf
        %1884 = vmax.xlane.f32.xlu0 %v1883
        %v1885 = vpop.xlane.xlu0 %1884
        %v1887 = vrot.slane %v1885, 1
        %v1888 = vrot.slane %v1885, 2
        %v1889 = vrot.slane %v1885, 3
        %v1890 = vrot.slane %v1885, 4
        %v1891 = vrot.slane %v1885, 5
        %v1892 = vrot.slane %v1885, 6
        %v1893 = vrot.slane %v1885, 7
        %v1902 = vsub.f32 %v1359, %v1885
        %v1903 = vsub.f32 %v1429, %v1887
        %v1904 = vsub.f32 %v1499, %v1888
        %v1905 = vsub.f32 %v1569, %v1889
        %v1906 = vsub.f32 %v1639, %v1890
        %v1907 = vsub.f32 %v1709, %v1891
        %v1908 = vsub.f32 %v1779, %v1892
        %v1909 = vsub.f32 %v1849, %v1893
        %v1910 = vmul.f32 %v1902, 1.442695
        %v1911 = vpow.pop %v1910
        %v1912 = vmul.f32 %v1903, 1.442695
        %v1913 = vpow.pop %v1912
        %v1914 = vmul.f32 %v1904, 1.442695
        %v1915 = vpow.pop %v1914
        %v1916 = vmul.f32 %v1905, 1.442695
        %v1917 = vpow.pop %v1916
        %v1918 = vmul.f32 %v1906, 1.442695
        %v1919 = vpow.pop %v1918
        %v1920 = vmul.f32 %v1907, 1.442695
        %v1921 = vpow.pop %v1920
        %v1922 = vmul.f32 %v1908, 1.442695
        %v1923 = vpow.pop %v1922
        %v1924 = vmul.f32 %v1909, 1.442695
        %v1925 = vpow.pop %v1924
        %v1934 = vrot.slane %v1913, 7
        %v1935 = vsel %vm1861, %v1934, %v1911
        %v1936 = vrot.slane %v1915, 6
        %v1937 = vsel %vm1864, %v1936, %v1935
        %v1938 = vrot.slane %v1917, 5
        %v1939 = vsel %vm1867, %v1938, %v1937
        %v1940 = vrot.slane %v1919, 4
        %v1941 = vsel %vm1870, %v1940, %v1939
        %v1942 = vrot.slane %v1921, 3
        %v1943 = vsel %vm1873, %v1942, %v1941
        %v1944 = vrot.slane %v1923, 2
        %v1945 = vsel %vm1876, %v1944, %v1943
        %v1946 = vrot.slane %v1925, 1
        %v1947 = vsel %vm1879, %v1946, %v1945
        %v1949 = vsel %vm1882, %v1947, 0.0
        %1950 = vadd.xlane.f32.xlu0 %v1949
        %v1951 = vpop.xlane.xlu0 %1950
        %v1952 = vrcp.pop %v1951
        %v1954 = vrot.slane %v1952, 1
        %v1955 = vrot.slane %v1952, 2
        %v1956 = vrot.slane %v1952, 3
        %v1957 = vrot.slane %v1952, 4
        %v1958 = vrot.slane %v1952, 5
        %v1959 = vrot.slane %v1952, 6
        %v1960 = vrot.slane %v1952, 7
        %v1969 = vmul.f32 %v1911, %v1952
        %v1970 = vmul.f32 %v1913, %v1954
        %v1971 = vmul.f32 %v1915, %v1955
        %v1972 = vmul.f32 %v1917, %v1956
        %v1973 = vmul.f32 %v1919, %v1957
        %v1974 = vmul.f32 %v1921, %v1958
        %v1975 = vmul.f32 %v1923, %v1959
        %v1976 = vmul.f32 %v1925, %v1960
        %v1977 = vld [vmem:[%s339] sm:$0xff]
        %v1979 = vrot.slane %v1977, 1
        %v1980 = vrot.slane %v1977, 2
        %v1981 = vrot.slane %v1977, 3
        %v1982 = vrot.slane %v1977, 4
        %v1983 = vrot.slane %v1977, 5
        %v1984 = vrot.slane %v1977, 6
        %v1985 = vrot.slane %v1977, 7
        %v1994 = vmul.f32 %v1969, %v1977
        %v1995 = vmul.f32 %v1970, %v1979
        %v1996 = vmul.f32 %v1971, %v1980
        %v1997 = vmul.f32 %v1972, %v1981
        %v1998 = vmul.f32 %v1973, %v1982
        %v1999 = vmul.f32 %v1974, %v1983
        %v2000 = vmul.f32 %v1975, %v1984
        %v2001 = vmul.f32 %v1976, %v1985
        %v2010 = vrot.slane %v1995, 7
        %v2011 = vsel %vm1861, %v2010, %v1994
        %v2012 = vrot.slane %v1996, 6
        %v2013 = vsel %vm1864, %v2012, %v2011
        %v2014 = vrot.slane %v1997, 5
        %v2015 = vsel %vm1867, %v2014, %v2013
        %v2016 = vrot.slane %v1998, 4
        %v2017 = vsel %vm1870, %v2016, %v2015
        %v2018 = vrot.slane %v1999, 3
        %v2019 = vsel %vm1873, %v2018, %v2017
        %v2020 = vrot.slane %v2000, 2
        %v2021 = vsel %vm1876, %v2020, %v2019
        %v2022 = vrot.slane %v2001, 1
        %v2023 = vsel %vm1879, %v2022, %v2021
        %v2025 = vsel %vm1882, %v2023, 0.0
        %2026 = vadd.xlane.f32.xlu0 %v2025
        %v2027 = vpop.xlane.xlu0 %2026
        %2028 = vst [vmem:[%s383] sm:$0xff] %v2027
        %s2029 = sand.u32 %s199, 1
        %s2030 = scalar_lea.sflag [#allocation5], %s2029
        %s2031 = sand.u32 %s199, 1
        %s2032 = smul.addr %s2031, 8
        %s2033 = scalar_lea.vmem [#allocation11], %s2032
        // Predicated region
        $region65: #{tpu_custom_call.1} parent=47 // pred_check
          %p2034 = pneg %p209
        $region66: #{tpu_custom_call.1} parent=47 // pred_check_branch
          %2036 = sbr.rel (%p2034) target = $region68
        $region67: #{tpu_custom_call.1} parent=47 // pred_region
          %s2038 = ssub.s32 128, 128
          %2039 = vsyncadd %s2030, %s2038
          %s2040 = smul.addr %s29, 128
          %s2041 = scalar_lea.hbm %s7, %s2040
          %s2043 = sshll.u32 %s2033, 4
          %s2044 = int_to_ptr.vmem [resolvable:$true] %s2043
          %2046 = dma.vmem_to_hbm [thread:$0]  %s2044, 128, %s2041, %s2030
        $region68: #{tpu_custom_call.1} parent=47 // pred_fallthru
          _
      $region48: #{tpu_custom_call.1} parent=5 // pred_fallthru
        _
      %p2047 = scmp.le.s32.totalorder 2, %s24
      // Predicated region
      $region69: #{tpu_custom_call.1} parent=5 // pred_check
        %p2048 = pneg %p2047
      $region70: #{tpu_custom_call.1} parent=5 // pred_check_branch
        %2050 = sbr.rel (%p2048) target = $region72
      $region71: #{tpu_custom_call.1} parent=5 // pred_region
        %s2051 = ssub.s32 %s24, 2
        // Predicated region
        $region73: #{tpu_custom_call.1} parent=71 // pred_check
          %p2052 = pneg %p215
        $region74: #{tpu_custom_call.1} parent=71 // pred_check_branch
          %2054 = sbr.rel (%p2052) target = $region76
        $region75: #{tpu_custom_call.1} parent=71 // pred_region
          %s2055 = sand.u32 %s200, 1
          %s2056 = scalar_lea.sflag [#allocation5], %s2055
          %s2057 = sand.u32 %s200, 1
          %s2058 = smul.addr %s2057, 8
          %s2059 = scalar_lea.vmem [#allocation11], %s2058
          %2060 = dma.done %s2056, 128
        $region76: #{tpu_custom_call.1} parent=71 // pred_fallthru
          _
      $region72: #{tpu_custom_call.1} parent=5 // pred_fallthru
        _
    $region6: #{tpu_custom_call.1} parent=1 // loop_footer
      %s28 = sadd.s32 1, %s24
    $region7: #{tpu_custom_call.1} parent=1 // loop_footer_branch
      %23 = sbr.rel target = $region3
    $region8: #{tpu_custom_call.1} parent=1 // loop_exit
      _
    %2061 = vsyncpa [#allocation4], 1
    %s2062 = scalar_lea.sflag [#allocation4], 1
    %2063 = vsyncpa %s2062, 1
    %2064 = vsyncpa [#allocation7], 1
    %s2065 = scalar_lea.sflag [#allocation7], 1
    %2066 = vsyncpa %s2065, 1
    %2067 = vsyncpa [#allocation10], 1
    %2068 = vsyncpa [#allocation5], 1
    %s2069 = scalar_lea.sflag [#allocation5], 1
    %2070 = vsyncpa %s2069, 1

</llo_original>
